<compile_context>
chip_gen: v5e
topology: v5e:2x2
jax: 0.10.0
libtpu: 0.0.40
codegen_flags: <defaults>
</compile_context>

<pallas_src>
import functools

import jax
import jax.numpy as jnp
from jax import lax
from jax.experimental import pallas as pl
from jax.experimental.pallas import tpu as pltpu


def _round_up(x, m):
    return ((x + m - 1) // m) * m


def _choose_batch_shard(B):
    """Pick (BS, Bp).  BS is a multiple of 8, capped at 64 (vreg-resident gate math).
    Prefer >=2 shards when B >= 16 (feeds megacore / v7x's 2nd TC), then fewer shards
    (larger BS keeps the serial per-step chain short), then less zero-padding."""
    Bp0 = _round_up(max(B, 8), 8)
    want_multi = Bp0 >= 16
    cands = []
    for bs in range(8, min(64, Bp0) + 1, 8):
        bp = _round_up(Bp0, bs)
        n_shards = bp // bs
        multi_pen = 0 if (n_shards >= 2 or not want_multi) else 1
        cands.append(((multi_pen, -bs, bp - B), bs, bp))
    _, bs, bp = min(cands)
    return bs, bp


def _derive_time_chunk(T, BS, D, Hp, Op, use_bf16):
    """Size the time chunk from a per-generation VMEM budget and snap to a divisor of T."""
    try:
        phys = int(pltpu.get_tpu_info().vmem_capacity_bytes)
    except Exception:
        phys = 64 << 20                              # assume v7x-sized VMEM if query fails
    vmem_limit = min((phys * 3) // 4, 100 << 20)     # ~48 MiB on v7x, ~96-100 MiB on v5e/v6e
    budget = (vmem_limit * 4) // 5                   # headroom for internal scratch

    wb = 2 if use_bf16 else 4                        # weight bytes
    gxb = 2 if use_bf16 else 4                       # gx staging bytes
    fixed = 2 * wb * (D * 4 * Hp + Hp * 4 * Hp + Hp * Op)   # weights (x2: pipeline buffers)
    fixed += 8 * (4 * Hp + Op)                               # biases (f32, x2)
    fixed += 4 * (2 * BS * Hp + 2 * BS * Op)                 # h, c scratch + out buffers
    per_t = BS * 4 * Hp * gxb + 2 * BS * D * 4               # gx staging + 2x x chunk (f32)

    tt = max(8, min((budget - fixed) // per_t, 256))
    tt = max(1, min(int(tt), T))

    # Prefer a chunk that divides T exactly -> no per-step tail mask in the recurrence.
    for d in range(tt, 0, -1):
        if T % d == 0:
            if 2 * d >= tt or d == T:
                return d, False, int(vmem_limit)
            break
    return tt, True, int(vmem_limit)


def _lstm_kernel(Tt, T, unroll, needs_mask,
                 x_ref, wih_ref, whh_ref, b_ref, wfc_ref, bfc_ref,
                 out_ref, gx_scr, h_scr, c_scr):
    """One (batch-shard, time-chunk) grid step of the LSTM recurrence + final fc.

    x_ref   : (Tt, BS, D)       contiguous time-major input chunk for this shard
    wih_ref : (D, 4Hp)          input->gates weights (gate-blocked, transposed)
    whh_ref : (Hp, 4Hp)         hidden->gates weights (gate-blocked, transposed)
    b_ref   : (1, 4Hp)  f32     b_ih + b_hh (gate-blocked)
    wfc_ref : (Hp, Op)          fc weights (transposed)
    bfc_ref : (1, Op)   f32     fc bias
    out_ref : (BS, Op)  f32     logits for the last timestep (this batch shard)
    gx_scr  : (Tt*BS, 4Hp)      lane-dense staging of the hoisted x-projection
    h_scr/c_scr : (BS, Hp) f32  recurrent state carried across time chunks

    NOTE: correctness of h_scr/c_scr relies on the grid order being
    (batch 'parallel' OUTER, time 'arbitrary' INNER) so every batch shard runs all of
    its time chunks consecutively on one core.  Do not reorder the grid axes.
    """
    tc = pl.program_id(1)                       # time-chunk index (serial axis)
    BS, Hp = h_scr.shape
    D = x_ref.shape[-1]

    @pl.when(tc == 0)
    def _():
        h_scr[...] = jnp.zeros_like(h_scr)
        c_scr[...] = jnp.zeros_like(c_scr)

    # --- input projection hoisted out of the recurrence: one big MXU matmul, bias fused,
    #     stored in its natural lane-dense 2D layout (unmasked vst). ---
    x_chunk = x_ref[...].reshape(Tt * BS, D).astype(wih_ref.dtype)
    gx = jnp.dot(x_chunk, wih_ref[...], preferred_element_type=jnp.float32) + b_ref[...]
    gx_scr[...] = gx.astype(gx_scr.dtype)

    # --- recurrence: h/c live in vregs, W_hh loaded once per chunk, partial unroll ---
    whh = whh_ref[...]
    h0 = h_scr[...]
    c0 = c_scr[...]

    def step(s, carry):
        h, c = carry
        row = pl.multiple_of(s * BS, 8)                     # BS is a multiple of 8
        g = (gx_scr[pl.ds(row, BS), :].astype(jnp.float32)
             + jnp.dot(h.astype(whh.dtype), whh, preferred_element_type=jnp.float32))
        i_g = jax.nn.sigmoid(g[:, 0 * Hp:1 * Hp])           # lane-aligned 128-wide slices
        f_g = jax.nn.sigmoid(g[:, 1 * Hp:2 * Hp])
        g_g = jnp.tanh(g[:, 2 * Hp:3 * Hp])
        o_g = jax.nn.sigmoid(g[:, 3 * Hp:4 * Hp])
        c_new = f_g * c + i_g * g_g
        h_new = o_g * jnp.tanh(c_new)
        if needs_mask:                                      # only traced when Tt doesn't divide T
            valid = (tc * Tt + s) < T                       # tail x is zero-padded (no garbage)
            h_new = jnp.where(valid, h_new, h)
            c_new = jnp.where(valid, c_new, c)
        return (h_new, c_new)

    h, c = lax.fori_loop(0, Tt, step, (h0, c0), unroll=unroll)

    h_scr[...] = h
    c_scr[...] = c

    # --- final Linear on the last hidden state (lane-dense padded output) ---
    @pl.when(tc == pl.num_programs(1) - 1)
    def _():
        out_ref[...] = (
            jnp.dot(h.astype(wfc_ref.dtype), wfc_ref[...],
                    preferred_element_type=jnp.float32)
            + bfc_ref[...]
        ).astype(out_ref.dtype)


def lstm_model_forward(x_btd, params, *, use_bf16=False):
    """x_btd: (B, T, D) float32 (PyTorch batch_first convention)."""
    B, T, D = x_btd.shape
    H = params["w_hh"].shape[1]
    O = params["w_fc"].shape[0]

    # --- padded, (8,128)-aligned shapes & resource-sized tiles ---
    BS, Bp = _choose_batch_shard(B)
    n_bs = Bp // BS
    Hp = _round_up(H, 128)
    Op = _round_up(O, 128)
    Tt, needs_mask, vmem_limit = _derive_time_chunk(T, BS, D, Hp, Op, use_bf16)
    n_tc = pl.cdiv(T, Tt)
    Tp = n_tc * Tt
    unroll = max(1, min(8, Tt))

    cdt = jnp.bfloat16 if use_bf16 else jnp.float32         # MXU operand / gx staging dtype

    # --- layout plumbing (plain JAX glue) ---
    # Shard-major contiguous chunks: (n_bs, Tp, BS, D); each (Tt, BS, D) block is one slab.
    x_pad = jnp.pad(x_btd, ((0, Bp - B), (0, Tp - T), (0, 0)))          # (Bp, Tp, D), zero tail
    x_shard = x_pad.reshape(n_bs, BS, Tp, D).transpose(0, 2, 1, 3)      # (n_bs, Tp, BS, D)

    def pad_gates(w_t):                                                 # (K, 4H) -> (K, 4Hp)
        K = w_t.shape[0]
        return jnp.pad(w_t.reshape(K, 4, H),
                       ((0, 0), (0, 0), (0, Hp - H))).reshape(K, 4 * Hp)

    wih_t = pad_gates(params["w_ih"].T).astype(cdt)                     # (D, 4Hp)
    whh_t = jnp.pad(pad_gates(params["w_hh"].T),
                    ((0, Hp - H), (0, 0))).astype(cdt)                  # (Hp, 4Hp)
    bias = pad_gates((params["b_ih"] + params["b_hh"]).reshape(1, 4 * H))   # (1, 4Hp) f32
    wfc_t = jnp.pad(params["w_fc"].T, ((0, Hp - H), (0, Op - O))).astype(cdt)   # (Hp, Op)
    bfc = jnp.pad(params["b_fc"].reshape(1, O), ((0, 0), (0, Op - O)))  # (1, Op) f32

    kernel = functools.partial(_lstm_kernel, Tt, T, unroll, needs_mask)

    out_padded = pl.pallas_call(
        kernel,
        out_shape=jax.ShapeDtypeStruct((Bp, Op), jnp.float32),
        grid=(n_bs, n_tc),                    # batch shards OUTER (parallel), time INNER (serial)
        in_specs=[
            pl.BlockSpec((None, Tt, BS, D), lambda b, t: (b, t, 0, 0)),   # x chunks (pipelined)
            pl.BlockSpec((D, 4 * Hp), lambda b, t: (0, 0)),               # W_ih (resident)
            pl.BlockSpec((Hp, 4 * Hp), lambda b, t: (0, 0)),              # W_hh (resident)
            pl.BlockSpec((1, 4 * Hp), lambda b, t: (0, 0)),               # bias
            pl.BlockSpec((Hp, Op), lambda b, t: (0, 0)),                  # W_fc
            pl.BlockSpec((1, Op), lambda b, t: (0, 0)),                   # b_fc
        ],
        out_specs=pl.BlockSpec((BS, Op), lambda b, t: (b, 0)),
        scratch_shapes=[
            pltpu.VMEM((Tt * BS, 4 * Hp), cdt),          # per-chunk x-projection (2D, lane-dense)
            pltpu.VMEM((BS, Hp), jnp.float32),           # h (carried across time chunks)
            pltpu.VMEM((BS, Hp), jnp.float32),           # c (carried across time chunks)
        ],
        compiler_params=pltpu.CompilerParams(
            dimension_semantics=("parallel", "arbitrary"),
            vmem_limit_bytes=vmem_limit,
        ),
    )(x_shard, wih_t, whh_t, bias, wfc_t, bfc)

    return out_padded[:B, :O]


def lstm_model_reference(x_btd, params):
    """Pure-JAX reference matching torch.nn.LSTM(batch_first=True) + Linear."""
    B, T, D = x_btd.shape
    H = params["w_hh"].shape[1]
    w_ih, w_hh = params["w_ih"], params["w_hh"]
    b = params["b_ih"] + params["b_hh"]

    def step(carry, x_t):
        h, c = carry
        gates = x_t @ w_ih.T + h @ w_hh.T + b
        i = jax.nn.sigmoid(gates[:, 0 * H:1 * H])
        f = jax.nn.sigmoid(gates[:, 1 * H:2 * H])
        g = jnp.tanh(gates[:, 2 * H:3 * H])
        o = jax.nn.sigmoid(gates[:, 3 * H:4 * H])
        c = f * c + i * g
        h = o * jnp.tanh(c)
        return (h, c), None

    h0 = jnp.zeros((B, H), jnp.float32)
    c0 = jnp.zeros((B, H), jnp.float32)
    (h_last, _), _ = lax.scan(step, (h0, c0), jnp.transpose(x_btd, (1, 0, 2)))
    return h_last @ params["w_fc"].T + params["b_fc"]


def init_params(key, input_dim, hidden_dim, output_dim):
    """Deterministic init mirroring PyTorch shapes (uniform +-1/sqrt(H))."""
    ks = jax.random.split(key, 6)
    s = 1.0 / jnp.sqrt(hidden_dim)
    u = lambda k, shape: jax.random.uniform(k, shape, jnp.float32, -s, s)
    return {
        "w_ih": u(ks[0], (4 * hidden_dim, input_dim)),
        "w_hh": u(ks[1], (4 * hidden_dim, hidden_dim)),
        "b_ih": u(ks[2], (4 * hidden_dim,)),
        "b_hh": u(ks[3], (4 * hidden_dim,)),
        "w_fc": u(ks[4], (output_dim, hidden_dim)),
        "b_fc": u(ks[5], (output_dim,)),
    }


if __name__ == "__main__":
    B, T, D, H, O = 2, 8, 16, 32, 4   # batch, seq, input_dim, hidden_dim, output_dim

    key = jax.random.PRNGKey(0)
    k_x, k_p = jax.random.split(key)
    x = jax.random.normal(k_x, (B, T, D), jnp.float32)
    params = init_params(k_p, D, H, O)

    ref = lstm_model_reference(x, params)

    # Exact-parity f32 path (default).
    out = jax.block_until_ready(lstm_model_forward(x, params, use_bf16=False))
    assert out.shape == (B, O)
    assert jnp.allclose(out, ref, atol=1e-4, rtol=1e-4), "f32 kernel mismatch vs reference"

    # bf16-MXU fast path (f32 accumulation); tolerance loosened accordingly.
    out_bf16 = jax.block_until_ready(lstm_model_forward(x, params, use_bf16=True))
    assert jnp.allclose(out_bf16, ref, atol=5e-2, rtol=5e-2), "bf16 kernel mismatch vs reference"

    print("KERNEL_OK")
</pallas_src>

<mosaic_0001>
module attributes {stable_mosaic.version = 11 : i64} {
  func.func @_lstm_kernel(%arg0: i32, %arg1: i32, %arg2: memref<1x8x8x16xf32, #tpu.memory_space<vmem>>, %arg3: memref<16x512xf32, #tpu.memory_space<vmem>>, %arg4: memref<128x512xf32, #tpu.memory_space<vmem>>, %arg5: memref<1x512xf32, #tpu.memory_space<vmem>>, %arg6: memref<128x128xf32, #tpu.memory_space<vmem>>, %arg7: memref<1x128xf32, #tpu.memory_space<vmem>>, %arg8: memref<8x128xf32, #tpu.memory_space<vmem>>, %arg9: memref<64x512xf32, #tpu.memory_space<vmem>>, %arg10: memref<8x128xf32, #tpu.memory_space<vmem>>, %arg11: memref<8x128xf32, #tpu.memory_space<vmem>>) attributes {dimension_semantics = [#tpu.dimension_semantics<parallel>, #tpu.dimension_semantics<arbitrary>], iteration_bounds = array<i64: 1, 1>, scalar_prefetch = 0 : i64, scratch_operands = 3 : i64, tpu.core_type = #tpu.core_type<tc>, window_params = [{transform_indices = @transform_0, window_bounds = array<i64: 1, 8, 8, 16>}, {pipeline_mode = #tpu.pipeline_mode<synchronous>, transform_indices = @transform_1, window_bounds = array<i64: 16, 512>}, {pipeline_mode = #tpu.pipeline_mode<synchronous>, transform_indices = @transform_2, window_bounds = array<i64: 128, 512>}, {pipeline_mode = #tpu.pipeline_mode<synchronous>, transform_indices = @transform_3, window_bounds = array<i64: 1, 512>}, {pipeline_mode = #tpu.pipeline_mode<synchronous>, transform_indices = @transform_4, window_bounds = array<i64: 128, 128>}, {pipeline_mode = #tpu.pipeline_mode<synchronous>, transform_indices = @transform_5, window_bounds = array<i64: 1, 128>}, {transform_indices = @transform_6, window_bounds = array<i64: 8, 128>}]} {
    %c0_i32 = arith.constant 0 : i32
    %0 = arith.cmpi eq, %arg1, %c0_i32 : i32
    %1 = arith.extui %0 : i1 to i32
    %c0_i32_0 = arith.constant 0 : i32
    %2 = arith.cmpi ne, %1, %c0_i32_0 : i32
    scf.if %2 {
      %cst_71 = arith.constant 0.000000e+00 : f32
      %268 = vector.broadcast %cst_71 : f32 to vector<8x128xf32>
      %c0_72 = arith.constant 0 : index
      %c0_73 = arith.constant 0 : index
      %269 = vector.load %arg10[%c0_72, %c0_73] : memref<8x128xf32, #tpu.memory_space<vmem>>, vector<8x128xf32>
      tpu.vector_store %arg10[%c0_72, %c0_73], %268 {strides = array<i32>} : memref<8x128xf32, #tpu.memory_space<vmem>>, vector<8x128xf32>,
      %cst_74 = arith.constant 0.000000e+00 : f32
      %270 = vector.broadcast %cst_74 : f32 to vector<8x128xf32>
      %c0_75 = arith.constant 0 : index
      %c0_76 = arith.constant 0 : index
      %271 = vector.load %arg11[%c0_75, %c0_76] : memref<8x128xf32, #tpu.memory_space<vmem>>, vector<8x128xf32>
      tpu.vector_store %arg11[%c0_75, %c0_76], %270 {strides = array<i32>} : memref<8x128xf32, #tpu.memory_space<vmem>>, vector<8x128xf32>,
    } else {
    }
    %c0 = arith.constant 0 : index
    %c0_1 = arith.constant 0 : index
    %c0_2 = arith.constant 0 : index
    %c0_3 = arith.constant 0 : index
    %3 = vector.load %arg2[%c0, %c0_1, %c0_2, %c0_3] : memref<1x8x8x16xf32, #tpu.memory_space<vmem>>, vector<1x8x8x16xf32>
    %4 = vector.shape_cast %3 : vector<1x8x8x16xf32> to vector<8x8x16xf32>
    %5 = vector.shape_cast %4 : vector<8x8x16xf32> to vector<64x16xf32>
    %c0_4 = arith.constant 0 : index
    %c0_5 = arith.constant 0 : index
    %6 = vector.load %arg3[%c0_4, %c0_5] : memref<16x512xf32, #tpu.memory_space<vmem>>, vector<16x512xf32>
    %cst = arith.constant dense<0.000000e+00> : vector<64x512xf32>
    %7 = tpu.matmul %5, %6, %cst {dimension_numbers = #tpu.dot_dimension_numbers<[1], [0], [0], [1], [0, 0, 1, 1], [], []>} : vector<64x16xf32>, vector<16x512xf32>, vector<64x512xf32> -> vector<64x512xf32>
    %c0_6 = arith.constant 0 : index
    %c0_7 = arith.constant 0 : index
    %8 = vector.load %arg5[%c0_6, %c0_7] : memref<1x512xf32, #tpu.memory_space<vmem>>, vector<1x512xf32>
    %9 = vector.broadcast %8 : vector<1x512xf32> to vector<64x512xf32>
    %10 = arith.addf %7, %9 : vector<64x512xf32>
    %c0_8 = arith.constant 0 : index
    %c0_9 = arith.constant 0 : index
    %11 = vector.load %arg9[%c0_8, %c0_9] : memref<64x512xf32, #tpu.memory_space<vmem>>, vector<64x512xf32>
    tpu.vector_store %arg9[%c0_8, %c0_9], %10 {strides = array<i32>} : memref<64x512xf32, #tpu.memory_space<vmem>>, vector<64x512xf32>,
    %c0_10 = arith.constant 0 : index
    %c0_11 = arith.constant 0 : index
    %12 = vector.load %arg4[%c0_10, %c0_11] : memref<128x512xf32, #tpu.memory_space<vmem>>, vector<128x512xf32>
    %c0_12 = arith.constant 0 : index
    %c0_13 = arith.constant 0 : index
    %13 = vector.load %arg10[%c0_12, %c0_13] : memref<8x128xf32, #tpu.memory_space<vmem>>, vector<8x128xf32>
    %c0_14 = arith.constant 0 : index
    %c0_15 = arith.constant 0 : index
    %14 = vector.load %arg11[%c0_14, %c0_15] : memref<8x128xf32, #tpu.memory_space<vmem>>, vector<8x128xf32>
    %c0_i32_16 = arith.constant 0 : i32
    %c8_i32 = arith.constant 8 : i32
    %15 = arith.muli %c0_i32_16, %c8_i32 : i32
    %16 = tpu.assume_multiple %15, 8 : i32
    %17 = arith.index_cast %16 : i32 to index
    %c0_17 = arith.constant 0 : index
    %18 = vector.load %arg9[%17, %c0_17] : memref<64x512xf32, #tpu.memory_space<vmem>>, vector<8x512xf32>
    %cst_18 = arith.constant dense<0.000000e+00> : vector<8x512xf32>
    %19 = tpu.matmul %13, %12, %cst_18 {dimension_numbers = #tpu.dot_dimension_numbers<[1], [0], [0], [1], [0, 0, 1, 1], [], []>} : vector<8x128xf32>, vector<128x512xf32>, vector<8x512xf32> -> vector<8x512xf32>
    %20 = arith.addf %18, %19 : vector<8x512xf32>
    %21 = vector.extract_strided_slice %20 {offsets = [0, 0], sizes = [8, 128], strides = [1, 1]} : vector<8x512xf32> to vector<8x128xf32>
    %22 = arith.negf %21 : vector<8x128xf32>
    %23 = math.exp %22 : vector<8x128xf32>
    %cst_19 = arith.constant 1.000000e+00 : f32
    %24 = vector.broadcast %cst_19 : f32 to vector<8x128xf32>
    %25 = arith.addf %24, %23 : vector<8x128xf32>
    %26 = arith.divf %24, %25 : vector<8x128xf32>
    %27 = vector.extract_strided_slice %20 {offsets = [0, 128], sizes = [8, 128], strides = [1, 1]} : vector<8x512xf32> to vector<8x128xf32>
    %28 = arith.negf %27 : vector<8x128xf32>
    %29 = math.exp %28 : vector<8x128xf32>
    %cst_20 = arith.constant 1.000000e+00 : f32
    %30 = vector.broadcast %cst_20 : f32 to vector<8x128xf32>
    %31 = arith.addf %30, %29 : vector<8x128xf32>
    %32 = arith.divf %30, %31 : vector<8x128xf32>
    %33 = vector.extract_strided_slice %20 {offsets = [0, 256], sizes = [8, 128], strides = [1, 1]} : vector<8x512xf32> to vector<8x128xf32>
    %34 = math.tanh %33 : vector<8x128xf32>
    %35 = vector.extract_strided_slice %20 {offsets = [0, 384], sizes = [8, 128], strides = [1, 1]} : vector<8x512xf32> to vector<8x128xf32>
    %36 = arith.negf %35 : vector<8x128xf32>
    %37 = math.exp %36 : vector<8x128xf32>
    %cst_21 = arith.constant 1.000000e+00 : f32
    %38 = vector.broadcast %cst_21 : f32 to vector<8x128xf32>
    %39 = arith.addf %38, %37 : vector<8x128xf32>
    %40 = arith.divf %38, %39 : vector<8x128xf32>
    %41 = arith.mulf %32, %14 : vector<8x128xf32>
    %42 = arith.mulf %26, %34 : vector<8x128xf32>
    %43 = arith.addf %41, %42 : vector<8x128xf32>
    %44 = math.tanh %43 : vector<8x128xf32>
    %45 = arith.mulf %40, %44 : vector<8x128xf32>
    %c1_i32 = arith.constant 1 : i32
    %c8_i32_22 = arith.constant 8 : i32
    %46 = arith.muli %c1_i32, %c8_i32_22 : i32
    %47 = tpu.assume_multiple %46, 8 : i32
    %48 = arith.index_cast %47 : i32 to index
    %c0_23 = arith.constant 0 : index
    %49 = vector.load %arg9[%48, %c0_23] : memref<64x512xf32, #tpu.memory_space<vmem>>, vector<8x512xf32>
    %cst_24 = arith.constant dense<0.000000e+00> : vector<8x512xf32>
    %50 = tpu.matmul %45, %12, %cst_24 {dimension_numbers = #tpu.dot_dimension_numbers<[1], [0], [0], [1], [0, 0, 1, 1], [], []>} : vector<8x128xf32>, vector<128x512xf32>, vector<8x512xf32> -> vector<8x512xf32>
    %51 = arith.addf %49, %50 : vector<8x512xf32>
    %52 = vector.extract_strided_slice %51 {offsets = [0, 0], sizes = [8, 128], strides = [1, 1]} : vector<8x512xf32> to vector<8x128xf32>
    %53 = arith.negf %52 : vector<8x128xf32>
    %54 = math.exp %53 : vector<8x128xf32>
    %cst_25 = arith.constant 1.000000e+00 : f32
    %55 = vector.broadcast %cst_25 : f32 to vector<8x128xf32>
    %56 = arith.addf %55, %54 : vector<8x128xf32>
    %57 = arith.divf %55, %56 : vector<8x128xf32>
    %58 = vector.extract_strided_slice %51 {offsets = [0, 128], sizes = [8, 128], strides = [1, 1]} : vector<8x512xf32> to vector<8x128xf32>
    %59 = arith.negf %58 : vector<8x128xf32>
    %60 = math.exp %59 : vector<8x128xf32>
    %cst_26 = arith.constant 1.000000e+00 : f32
    %61 = vector.broadcast %cst_26 : f32 to vector<8x128xf32>
    %62 = arith.addf %61, %60 : vector<8x128xf32>
    %63 = arith.divf %61, %62 : vector<8x128xf32>
    %64 = vector.extract_strided_slice %51 {offsets = [0, 256], sizes = [8, 128], strides = [1, 1]} : vector<8x512xf32> to vector<8x128xf32>
    %65 = math.tanh %64 : vector<8x128xf32>
    %66 = vector.extract_strided_slice %51 {offsets = [0, 384], sizes = [8, 128], strides = [1, 1]} : vector<8x512xf32> to vector<8x128xf32>
    %67 = arith.negf %66 : vector<8x128xf32>
    %68 = math.exp %67 : vector<8x128xf32>
    %cst_27 = arith.constant 1.000000e+00 : f32
    %69 = vector.broadcast %cst_27 : f32 to vector<8x128xf32>
    %70 = arith.addf %69, %68 : vector<8x128xf32>
    %71 = arith.divf %69, %70 : vector<8x128xf32>
    %72 = arith.mulf %63, %43 : vector<8x128xf32>
    %73 = arith.mulf %57, %65 : vector<8x128xf32>
    %74 = arith.addf %72, %73 : vector<8x128xf32>
    %75 = math.tanh %74 : vector<8x128xf32>
    %76 = arith.mulf %71, %75 : vector<8x128xf32>
    %c2_i32 = arith.constant 2 : i32
    %c8_i32_28 = arith.constant 8 : i32
    %77 = arith.muli %c2_i32, %c8_i32_28 : i32
    %78 = tpu.assume_multiple %77, 8 : i32
    %79 = arith.index_cast %78 : i32 to index
    %c0_29 = arith.constant 0 : index
    %80 = vector.load %arg9[%79, %c0_29] : memref<64x512xf32, #tpu.memory_space<vmem>>, vector<8x512xf32>
    %cst_30 = arith.constant dense<0.000000e+00> : vector<8x512xf32>
    %81 = tpu.matmul %76, %12, %cst_30 {dimension_numbers = #tpu.dot_dimension_numbers<[1], [0], [0], [1], [0, 0, 1, 1], [], []>} : vector<8x128xf32>, vector<128x512xf32>, vector<8x512xf32> -> vector<8x512xf32>
    %82 = arith.addf %80, %81 : vector<8x512xf32>
    %83 = vector.extract_strided_slice %82 {offsets = [0, 0], sizes = [8, 128], strides = [1, 1]} : vector<8x512xf32> to vector<8x128xf32>
    %84 = arith.negf %83 : vector<8x128xf32>
    %85 = math.exp %84 : vector<8x128xf32>
    %cst_31 = arith.constant 1.000000e+00 : f32
    %86 = vector.broadcast %cst_31 : f32 to vector<8x128xf32>
    %87 = arith.addf %86, %85 : vector<8x128xf32>
    %88 = arith.divf %86, %87 : vector<8x128xf32>
    %89 = vector.extract_strided_slice %82 {offsets = [0, 128], sizes = [8, 128], strides = [1, 1]} : vector<8x512xf32> to vector<8x128xf32>
    %90 = arith.negf %89 : vector<8x128xf32>
    %91 = math.exp %90 : vector<8x128xf32>
    %cst_32 = arith.constant 1.000000e+00 : f32
    %92 = vector.broadcast %cst_32 : f32 to vector<8x128xf32>
    %93 = arith.addf %92, %91 : vector<8x128xf32>
    %94 = arith.divf %92, %93 : vector<8x128xf32>
    %95 = vector.extract_strided_slice %82 {offsets = [0, 256], sizes = [8, 128], strides = [1, 1]} : vector<8x512xf32> to vector<8x128xf32>
    %96 = math.tanh %95 : vector<8x128xf32>
    %97 = vector.extract_strided_slice %82 {offsets = [0, 384], sizes = [8, 128], strides = [1, 1]} : vector<8x512xf32> to vector<8x128xf32>
    %98 = arith.negf %97 : vector<8x128xf32>
    %99 = math.exp %98 : vector<8x128xf32>
    %cst_33 = arith.constant 1.000000e+00 : f32
    %100 = vector.broadcast %cst_33 : f32 to vector<8x128xf32>
    %101 = arith.addf %100, %99 : vector<8x128xf32>
    %102 = arith.divf %100, %101 : vector<8x128xf32>
    %103 = arith.mulf %94, %74 : vector<8x128xf32>
    %104 = arith.mulf %88, %96 : vector<8x128xf32>
    %105 = arith.addf %103, %104 : vector<8x128xf32>
    %106 = math.tanh %105 : vector<8x128xf32>
    %107 = arith.mulf %102, %106 : vector<8x128xf32>
    %c3_i32 = arith.constant 3 : i32
    %c8_i32_34 = arith.constant 8 : i32
    %108 = arith.muli %c3_i32, %c8_i32_34 : i32
    %109 = tpu.assume_multiple %108, 8 : i32
    %110 = arith.index_cast %109 : i32 to index
    %c0_35 = arith.constant 0 : index
    %111 = vector.load %arg9[%110, %c0_35] : memref<64x512xf32, #tpu.memory_space<vmem>>, vector<8x512xf32>
    %cst_36 = arith.constant dense<0.000000e+00> : vector<8x512xf32>
    %112 = tpu.matmul %107, %12, %cst_36 {dimension_numbers = #tpu.dot_dimension_numbers<[1], [0], [0], [1], [0, 0, 1, 1], [], []>} : vector<8x128xf32>, vector<128x512xf32>, vector<8x512xf32> -> vector<8x512xf32>
    %113 = arith.addf %111, %112 : vector<8x512xf32>
    %114 = vector.extract_strided_slice %113 {offsets = [0, 0], sizes = [8, 128], strides = [1, 1]} : vector<8x512xf32> to vector<8x128xf32>
    %115 = arith.negf %114 : vector<8x128xf32>
    %116 = math.exp %115 : vector<8x128xf32>
    %cst_37 = arith.constant 1.000000e+00 : f32
    %117 = vector.broadcast %cst_37 : f32 to vector<8x128xf32>
    %118 = arith.addf %117, %116 : vector<8x128xf32>
    %119 = arith.divf %117, %118 : vector<8x128xf32>
    %120 = vector.extract_strided_slice %113 {offsets = [0, 128], sizes = [8, 128], strides = [1, 1]} : vector<8x512xf32> to vector<8x128xf32>
    %121 = arith.negf %120 : vector<8x128xf32>
    %122 = math.exp %121 : vector<8x128xf32>
    %cst_38 = arith.constant 1.000000e+00 : f32
    %123 = vector.broadcast %cst_38 : f32 to vector<8x128xf32>
    %124 = arith.addf %123, %122 : vector<8x128xf32>
    %125 = arith.divf %123, %124 : vector<8x128xf32>
    %126 = vector.extract_strided_slice %113 {offsets = [0, 256], sizes = [8, 128], strides = [1, 1]} : vector<8x512xf32> to vector<8x128xf32>
    %127 = math.tanh %126 : vector<8x128xf32>
    %128 = vector.extract_strided_slice %113 {offsets = [0, 384], sizes = [8, 128], strides = [1, 1]} : vector<8x512xf32> to vector<8x128xf32>
    %129 = arith.negf %128 : vector<8x128xf32>
    %130 = math.exp %129 : vector<8x128xf32>
    %cst_39 = arith.constant 1.000000e+00 : f32
    %131 = vector.broadcast %cst_39 : f32 to vector<8x128xf32>
    %132 = arith.addf %131, %130 : vector<8x128xf32>
    %133 = arith.divf %131, %132 : vector<8x128xf32>
    %134 = arith.mulf %125, %105 : vector<8x128xf32>
    %135 = arith.mulf %119, %127 : vector<8x128xf32>
    %136 = arith.addf %134, %135 : vector<8x128xf32>
    %137 = math.tanh %136 : vector<8x128xf32>
    %138 = arith.mulf %133, %137 : vector<8x128xf32>
    %c4_i32 = arith.constant 4 : i32
    %c8_i32_40 = arith.constant 8 : i32
    %139 = arith.muli %c4_i32, %c8_i32_40 : i32
    %140 = tpu.assume_multiple %139, 8 : i32
    %141 = arith.index_cast %140 : i32 to index
    %c0_41 = arith.constant 0 : index
    %142 = vector.load %arg9[%141, %c0_41] : memref<64x512xf32, #tpu.memory_space<vmem>>, vector<8x512xf32>
    %cst_42 = arith.constant dense<0.000000e+00> : vector<8x512xf32>
    %143 = tpu.matmul %138, %12, %cst_42 {dimension_numbers = #tpu.dot_dimension_numbers<[1], [0], [0], [1], [0, 0, 1, 1], [], []>} : vector<8x128xf32>, vector<128x512xf32>, vector<8x512xf32> -> vector<8x512xf32>
    %144 = arith.addf %142, %143 : vector<8x512xf32>
    %145 = vector.extract_strided_slice %144 {offsets = [0, 0], sizes = [8, 128], strides = [1, 1]} : vector<8x512xf32> to vector<8x128xf32>
    %146 = arith.negf %145 : vector<8x128xf32>
    %147 = math.exp %146 : vector<8x128xf32>
    %cst_43 = arith.constant 1.000000e+00 : f32
    %148 = vector.broadcast %cst_43 : f32 to vector<8x128xf32>
    %149 = arith.addf %148, %147 : vector<8x128xf32>
    %150 = arith.divf %148, %149 : vector<8x128xf32>
    %151 = vector.extract_strided_slice %144 {offsets = [0, 128], sizes = [8, 128], strides = [1, 1]} : vector<8x512xf32> to vector<8x128xf32>
    %152 = arith.negf %151 : vector<8x128xf32>
    %153 = math.exp %152 : vector<8x128xf32>
    %cst_44 = arith.constant 1.000000e+00 : f32
    %154 = vector.broadcast %cst_44 : f32 to vector<8x128xf32>
    %155 = arith.addf %154, %153 : vector<8x128xf32>
    %156 = arith.divf %154, %155 : vector<8x128xf32>
    %157 = vector.extract_strided_slice %144 {offsets = [0, 256], sizes = [8, 128], strides = [1, 1]} : vector<8x512xf32> to vector<8x128xf32>
    %158 = math.tanh %157 : vector<8x128xf32>
    %159 = vector.extract_strided_slice %144 {offsets = [0, 384], sizes = [8, 128], strides = [1, 1]} : vector<8x512xf32> to vector<8x128xf32>
    %160 = arith.negf %159 : vector<8x128xf32>
    %161 = math.exp %160 : vector<8x128xf32>
    %cst_45 = arith.constant 1.000000e+00 : f32
    %162 = vector.broadcast %cst_45 : f32 to vector<8x128xf32>
    %163 = arith.addf %162, %161 : vector<8x128xf32>
    %164 = arith.divf %162, %163 : vector<8x128xf32>
    %165 = arith.mulf %156, %136 : vector<8x128xf32>
    %166 = arith.mulf %150, %158 : vector<8x128xf32>
    %167 = arith.addf %165, %166 : vector<8x128xf32>
    %168 = math.tanh %167 : vector<8x128xf32>
    %169 = arith.mulf %164, %168 : vector<8x128xf32>
    %c5_i32 = arith.constant 5 : i32
    %c8_i32_46 = arith.constant 8 : i32
    %170 = arith.muli %c5_i32, %c8_i32_46 : i32
    %171 = tpu.assume_multiple %170, 8 : i32
    %172 = arith.index_cast %171 : i32 to index
    %c0_47 = arith.constant 0 : index
    %173 = vector.load %arg9[%172, %c0_47] : memref<64x512xf32, #tpu.memory_space<vmem>>, vector<8x512xf32>
    %cst_48 = arith.constant dense<0.000000e+00> : vector<8x512xf32>
    %174 = tpu.matmul %169, %12, %cst_48 {dimension_numbers = #tpu.dot_dimension_numbers<[1], [0], [0], [1], [0, 0, 1, 1], [], []>} : vector<8x128xf32>, vector<128x512xf32>, vector<8x512xf32> -> vector<8x512xf32>
    %175 = arith.addf %173, %174 : vector<8x512xf32>
    %176 = vector.extract_strided_slice %175 {offsets = [0, 0], sizes = [8, 128], strides = [1, 1]} : vector<8x512xf32> to vector<8x128xf32>
    %177 = arith.negf %176 : vector<8x128xf32>
    %178 = math.exp %177 : vector<8x128xf32>
    %cst_49 = arith.constant 1.000000e+00 : f32
    %179 = vector.broadcast %cst_49 : f32 to vector<8x128xf32>
    %180 = arith.addf %179, %178 : vector<8x128xf32>
    %181 = arith.divf %179, %180 : vector<8x128xf32>
    %182 = vector.extract_strided_slice %175 {offsets = [0, 128], sizes = [8, 128], strides = [1, 1]} : vector<8x512xf32> to vector<8x128xf32>
    %183 = arith.negf %182 : vector<8x128xf32>
    %184 = math.exp %183 : vector<8x128xf32>
    %cst_50 = arith.constant 1.000000e+00 : f32
    %185 = vector.broadcast %cst_50 : f32 to vector<8x128xf32>
    %186 = arith.addf %185, %184 : vector<8x128xf32>
    %187 = arith.divf %185, %186 : vector<8x128xf32>
    %188 = vector.extract_strided_slice %175 {offsets = [0, 256], sizes = [8, 128], strides = [1, 1]} : vector<8x512xf32> to vector<8x128xf32>
    %189 = math.tanh %188 : vector<8x128xf32>
    %190 = vector.extract_strided_slice %175 {offsets = [0, 384], sizes = [8, 128], strides = [1, 1]} : vector<8x512xf32> to vector<8x128xf32>
    %191 = arith.negf %190 : vector<8x128xf32>
    %192 = math.exp %191 : vector<8x128xf32>
    %cst_51 = arith.constant 1.000000e+00 : f32
    %193 = vector.broadcast %cst_51 : f32 to vector<8x128xf32>
    %194 = arith.addf %193, %192 : vector<8x128xf32>
    %195 = arith.divf %193, %194 : vector<8x128xf32>
    %196 = arith.mulf %187, %167 : vector<8x128xf32>
    %197 = arith.mulf %181, %189 : vector<8x128xf32>
    %198 = arith.addf %196, %197 : vector<8x128xf32>
    %199 = math.tanh %198 : vector<8x128xf32>
    %200 = arith.mulf %195, %199 : vector<8x128xf32>
    %c6_i32 = arith.constant 6 : i32
    %c8_i32_52 = arith.constant 8 : i32
    %201 = arith.muli %c6_i32, %c8_i32_52 : i32
    %202 = tpu.assume_multiple %201, 8 : i32
    %203 = arith.index_cast %202 : i32 to index
    %c0_53 = arith.constant 0 : index
    %204 = vector.load %arg9[%203, %c0_53] : memref<64x512xf32, #tpu.memory_space<vmem>>, vector<8x512xf32>
    %cst_54 = arith.constant dense<0.000000e+00> : vector<8x512xf32>
    %205 = tpu.matmul %200, %12, %cst_54 {dimension_numbers = #tpu.dot_dimension_numbers<[1], [0], [0], [1], [0, 0, 1, 1], [], []>} : vector<8x128xf32>, vector<128x512xf32>, vector<8x512xf32> -> vector<8x512xf32>
    %206 = arith.addf %204, %205 : vector<8x512xf32>
    %207 = vector.extract_strided_slice %206 {offsets = [0, 0], sizes = [8, 128], strides = [1, 1]} : vector<8x512xf32> to vector<8x128xf32>
    %208 = arith.negf %207 : vector<8x128xf32>
    %209 = math.exp %208 : vector<8x128xf32>
    %cst_55 = arith.constant 1.000000e+00 : f32
    %210 = vector.broadcast %cst_55 : f32 to vector<8x128xf32>
    %211 = arith.addf %210, %209 : vector<8x128xf32>
    %212 = arith.divf %210, %211 : vector<8x128xf32>
    %213 = vector.extract_strided_slice %206 {offsets = [0, 128], sizes = [8, 128], strides = [1, 1]} : vector<8x512xf32> to vector<8x128xf32>
    %214 = arith.negf %213 : vector<8x128xf32>
    %215 = math.exp %214 : vector<8x128xf32>
    %cst_56 = arith.constant 1.000000e+00 : f32
    %216 = vector.broadcast %cst_56 : f32 to vector<8x128xf32>
    %217 = arith.addf %216, %215 : vector<8x128xf32>
    %218 = arith.divf %216, %217 : vector<8x128xf32>
    %219 = vector.extract_strided_slice %206 {offsets = [0, 256], sizes = [8, 128], strides = [1, 1]} : vector<8x512xf32> to vector<8x128xf32>
    %220 = math.tanh %219 : vector<8x128xf32>
    %221 = vector.extract_strided_slice %206 {offsets = [0, 384], sizes = [8, 128], strides = [1, 1]} : vector<8x512xf32> to vector<8x128xf32>
    %222 = arith.negf %221 : vector<8x128xf32>
    %223 = math.exp %222 : vector<8x128xf32>
    %cst_57 = arith.constant 1.000000e+00 : f32
    %224 = vector.broadcast %cst_57 : f32 to vector<8x128xf32>
    %225 = arith.addf %224, %223 : vector<8x128xf32>
    %226 = arith.divf %224, %225 : vector<8x128xf32>
    %227 = arith.mulf %218, %198 : vector<8x128xf32>
    %228 = arith.mulf %212, %220 : vector<8x128xf32>
    %229 = arith.addf %227, %228 : vector<8x128xf32>
    %230 = math.tanh %229 : vector<8x128xf32>
    %231 = arith.mulf %226, %230 : vector<8x128xf32>
    %c7_i32 = arith.constant 7 : i32
    %c8_i32_58 = arith.constant 8 : i32
    %232 = arith.muli %c7_i32, %c8_i32_58 : i32
    %233 = tpu.assume_multiple %232, 8 : i32
    %234 = arith.index_cast %233 : i32 to index
    %c0_59 = arith.constant 0 : index
    %235 = vector.load %arg9[%234, %c0_59] : memref<64x512xf32, #tpu.memory_space<vmem>>, vector<8x512xf32>
    %cst_60 = arith.constant dense<0.000000e+00> : vector<8x512xf32>
    %236 = tpu.matmul %231, %12, %cst_60 {dimension_numbers = #tpu.dot_dimension_numbers<[1], [0], [0], [1], [0, 0, 1, 1], [], []>} : vector<8x128xf32>, vector<128x512xf32>, vector<8x512xf32> -> vector<8x512xf32>
    %237 = arith.addf %235, %236 : vector<8x512xf32>
    %238 = vector.extract_strided_slice %237 {offsets = [0, 0], sizes = [8, 128], strides = [1, 1]} : vector<8x512xf32> to vector<8x128xf32>
    %239 = arith.negf %238 : vector<8x128xf32>
    %240 = math.exp %239 : vector<8x128xf32>
    %cst_61 = arith.constant 1.000000e+00 : f32
    %241 = vector.broadcast %cst_61 : f32 to vector<8x128xf32>
    %242 = arith.addf %241, %240 : vector<8x128xf32>
    %243 = arith.divf %241, %242 : vector<8x128xf32>
    %244 = vector.extract_strided_slice %237 {offsets = [0, 128], sizes = [8, 128], strides = [1, 1]} : vector<8x512xf32> to vector<8x128xf32>
    %245 = arith.negf %244 : vector<8x128xf32>
    %246 = math.exp %245 : vector<8x128xf32>
    %cst_62 = arith.constant 1.000000e+00 : f32
    %247 = vector.broadcast %cst_62 : f32 to vector<8x128xf32>
    %248 = arith.addf %247, %246 : vector<8x128xf32>
    %249 = arith.divf %247, %248 : vector<8x128xf32>
    %250 = vector.extract_strided_slice %237 {offsets = [0, 256], sizes = [8, 128], strides = [1, 1]} : vector<8x512xf32> to vector<8x128xf32>
    %251 = math.tanh %250 : vector<8x128xf32>
    %252 = vector.extract_strided_slice %237 {offsets = [0, 384], sizes = [8, 128], strides = [1, 1]} : vector<8x512xf32> to vector<8x128xf32>
    %253 = arith.negf %252 : vector<8x128xf32>
    %254 = math.exp %253 : vector<8x128xf32>
    %cst_63 = arith.constant 1.000000e+00 : f32
    %255 = vector.broadcast %cst_63 : f32 to vector<8x128xf32>
    %256 = arith.addf %255, %254 : vector<8x128xf32>
    %257 = arith.divf %255, %256 : vector<8x128xf32>
    %258 = arith.mulf %249, %229 : vector<8x128xf32>
    %259 = arith.mulf %243, %251 : vector<8x128xf32>
    %260 = arith.addf %258, %259 : vector<8x128xf32>
    %261 = math.tanh %260 : vector<8x128xf32>
    %262 = arith.mulf %257, %261 : vector<8x128xf32>
    %c8_i32_64 = arith.constant 8 : i32
    %c0_65 = arith.constant 0 : index
    %c0_66 = arith.constant 0 : index
    %263 = vector.load %arg10[%c0_65, %c0_66] : memref<8x128xf32, #tpu.memory_space<vmem>>, vector<8x128xf32>
    tpu.vector_store %arg10[%c0_65, %c0_66], %262 {strides = array<i32>} : memref<8x128xf32, #tpu.memory_space<vmem>>, vector<8x128xf32>,
    %c0_67 = arith.constant 0 : index
    %c0_68 = arith.constant 0 : index
    %264 = vector.load %arg11[%c0_67, %c0_68] : memref<8x128xf32, #tpu.memory_space<vmem>>, vector<8x128xf32>
    tpu.vector_store %arg11[%c0_67, %c0_68], %260 {strides = array<i32>} : memref<8x128xf32, #tpu.memory_space<vmem>>, vector<8x128xf32>,
    %c0_i32_69 = arith.constant 0 : i32
    %265 = arith.cmpi eq, %arg1, %c0_i32_69 : i32
    %266 = arith.extui %265 : i1 to i32
    %c0_i32_70 = arith.constant 0 : i32
    %267 = arith.cmpi ne, %266, %c0_i32_70 : i32
    scf.if %267 {
      %c0_71 = arith.constant 0 : index
      %c0_72 = arith.constant 0 : index
      %268 = vector.load %arg6[%c0_71, %c0_72] : memref<128x128xf32, #tpu.memory_space<vmem>>, vector<128x128xf32>
      %cst_73 = arith.constant dense<0.000000e+00> : vector<8x128xf32>
      %269 = tpu.matmul %262, %268, %cst_73 {dimension_numbers = #tpu.dot_dimension_numbers<[1], [0], [0], [1], [0, 0, 1, 1], [], []>} : vector<8x128xf32>, vector<128x128xf32>, vector<8x128xf32> -> vector<8x128xf32>
      %c0_74 = arith.constant 0 : index
      %c0_75 = arith.constant 0 : index
      %270 = vector.load %arg7[%c0_74, %c0_75] : memref<1x128xf32, #tpu.memory_space<vmem>>, vector<1x128xf32>
      %271 = vector.broadcast %270 : vector<1x128xf32> to vector<8x128xf32>
      %272 = arith.addf %269, %271 : vector<8x128xf32>
      %c0_76 = arith.constant 0 : index
      %c0_77 = arith.constant 0 : index
      %273 = vector.load %arg8[%c0_76, %c0_77] : memref<8x128xf32, #tpu.memory_space<vmem>>, vector<8x128xf32>
      tpu.vector_store %arg8[%c0_76, %c0_77], %272 {strides = array<i32>} : memref<8x128xf32, #tpu.memory_space<vmem>>, vector<8x128xf32>,
    } else {
    }
    return
  }
  func.func @transform_0(%arg0: i32, %arg1: i32) -> (i32, i32, i32, i32) {
    %c0_i32 = arith.constant 0 : i32
    %c0_i32_0 = arith.constant 0 : i32
    %c0_i32_1 = arith.constant 0 : i32
    return %arg0, %arg1, %c0_i32, %c0_i32_0 : i32, i32, i32, i32
  }
  func.func @transform_1(%arg0: i32, %arg1: i32) -> (i32, i32) {
    %c0_i32 = arith.constant 0 : i32
    %c0_i32_0 = arith.constant 0 : i32
    %c0_i32_1 = arith.constant 0 : i32
    return %c0_i32, %c0_i32_0 : i32, i32
  }
  func.func @transform_2(%arg0: i32, %arg1: i32) -> (i32, i32) {
    %c0_i32 = arith.constant 0 : i32
    %c0_i32_0 = arith.constant 0 : i32
    %c0_i32_1 = arith.constant 0 : i32
    return %c0_i32, %c0_i32_0 : i32, i32
  }
  func.func @transform_3(%arg0: i32, %arg1: i32) -> (i32, i32) {
    %c0_i32 = arith.constant 0 : i32
    %c0_i32_0 = arith.constant 0 : i32
    %c0_i32_1 = arith.constant 0 : i32
    return %c0_i32, %c0_i32_0 : i32, i32
  }
  func.func @transform_4(%arg0: i32, %arg1: i32) -> (i32, i32) {
    %c0_i32 = arith.constant 0 : i32
    %c0_i32_0 = arith.constant 0 : i32
    %c0_i32_1 = arith.constant 0 : i32
    return %c0_i32, %c0_i32_0 : i32, i32
  }
  func.func @transform_5(%arg0: i32, %arg1: i32) -> (i32, i32) {
    %c0_i32 = arith.constant 0 : i32
    %c0_i32_0 = arith.constant 0 : i32
    %c0_i32_1 = arith.constant 0 : i32
    return %c0_i32, %c0_i32_0 : i32, i32
  }
  func.func @transform_6(%arg0: i32, %arg1: i32) -> (i32, i32) {
    %c0_i32 = arith.constant 0 : i32
    %c0_i32_0 = arith.constant 0 : i32
    return %arg0, %c0_i32 : i32, i32
  }
}

</mosaic_0001>

<llo_original>
// kernel: tpu_custom_call.1
$region0: #{tpu_custom_call.1}
  #allocation0 [shape = 'u32[]', space=smem, size = 0x4, offset = 0x4, fixed_abs, tag = 'smem constant byte address 0x4 - core index']
  #allocation1 [shape = 'u32[72,128]{1,0:T(1,128)}', space=vmem, size = 0x9000, scoped, tag = 'internal scratch']
  #allocation2 [shape = 'f32[64,512]{1,0:T(8,128)}', space=vmem, size = 0x20000, scoped, tag = 'scratch operand']
  #allocation3 [shape = 'f32[8,128]{1,0:T(8,128)}', space=vmem, size = 0x1000, scoped, tag = 'scratch operand']
  #allocation4 [shape = 'f32[8,128]{1,0:T(8,128)}', space=vmem, size = 0x1000, scoped, tag = 'scratch operand']
  %s0 = inlined_call_operand.hbm [shape: f32[1,8,8,16], index: 0, kind: input, shape index: {}]
  %s1 = inlined_call_operand.hbm [shape: f32[16,512], index: 1, kind: input, shape index: {}]
  %s2 = inlined_call_operand.hbm [shape: f32[128,512], index: 2, kind: input, shape index: {}]
  %s3 = inlined_call_operand.hbm [shape: f32[1,512], index: 3, kind: input, shape index: {}]
  %s4 = inlined_call_operand.hbm [shape: f32[128,128], index: 4, kind: input, shape index: {}]
  %s5 = inlined_call_operand.vmem [shape: f32[1,128], index: 5, kind: input, shape index: {}]
  %s6 = inlined_call_operand.hbm [shape: f32[8,128], index: 6, kind: output, shape index: {}]
  %s7 = sld [smem:[#allocation0]]
  $region62: #{tpu_custom_call.1} parent=0
    _
  %s9 = ssub.s32 1, %s7
  %s10 = scalar_select 0, %s9, %s7
  $region1: #{tpu_custom_call.1} parent=0
    #allocation5 [shape = 'u8[32768]{0}', space=vmem, size = 0x8000, scoped, tag = 'input window, operand 0, single buffered']
    #allocation6 [shape = 's32[1]{0}', space=sflag, size = 0x4, scoped, tag = 'scoped memory for tpu_custom_call.1']
    #allocation7 [shape = 's32[1]{0}', space=sflag, size = 0x4, scoped, tag = 'scoped memory for tpu_custom_call.1']
    #allocation8 [shape = 'u8[32768]{0}', space=vmem, size = 0x8000, scoped, tag = 'input window, operand 1, single buffered']
    #allocation9 [shape = 's32[1]{0}', space=sflag, size = 0x4, scoped, tag = 'scoped memory for tpu_custom_call.1']
    #allocation10 [shape = 'u8[262144]{0}', space=vmem, size = 0x40000, scoped, tag = 'input window, operand 2, single buffered']
    #allocation11 [shape = 'u8[2048]{0}', space=vmem, size = 0x800, scoped, tag = 'input window, operand 3, single buffered']
    #allocation12 [shape = 's32[1]{0}', space=sflag, size = 0x4, scoped, tag = 'scoped memory for tpu_custom_call.1']
    #allocation13 [shape = 'u8[65536]{0}', space=vmem, size = 0x10000, scoped, tag = 'input window, operand 4, single buffered']
    #allocation14 [shape = 'u8[4096]{0}', space=vmem, size = 0x1000, scoped, tag = 'output window, operand 0, single buffered']
    %11 = vsyncpa [#allocation6], 0
    %12 = vsyncpa [#allocation9], 0
    %13 = vsyncpa [#allocation12], 0
    %14 = vsyncpa [#allocation7], 0
    // Predicated region
    $region2: #{tpu_custom_call.1} parent=1 // pred_check
      _
    $region3: #{tpu_custom_call.1} parent=1 // pred_check_branch
      %16 = sbr.rel (0) target = $region5
    $region4: #{tpu_custom_call.1} parent=1 // pred_region
      %18 = vsyncadd [#allocation6], 0
      %s19 = sshll.u32 %s0, 4
      %s20 = int_to_ptr.hbm [resolvable:$true] %s19
      %s21 = sshll.u32 [#allocation5], 4
      %s22 = int_to_ptr.vmem [resolvable:$true] %s21
      %27 = dma.hbm_to_vmem [thread:$0]  %s20, 1024, %s22, [#allocation6], 128, 128, 8
    $region5: #{tpu_custom_call.1} parent=1 // pred_fallthru
      _
    // Predicated region
    $region6: #{tpu_custom_call.1} parent=1 // pred_check
      _
    $region7: #{tpu_custom_call.1} parent=1 // pred_check_branch
      %29 = sbr.rel (0) target = $region9
    $region8: #{tpu_custom_call.1} parent=1 // pred_region
      %31 = vsyncadd [#allocation9], 0
      %s32 = sshll.u32 %s1, 4
      %s33 = int_to_ptr.hbm [resolvable:$true] %s32
      %s34 = sshll.u32 [#allocation8], 4
      %s35 = int_to_ptr.vmem [resolvable:$true] %s34
      %40 = dma.hbm_to_vmem [thread:$0]  %s33, 1024, %s35, [#allocation9], 512, 512, 32
    $region9: #{tpu_custom_call.1} parent=1 // pred_fallthru
      _
    // Predicated region
    $region10: #{tpu_custom_call.1} parent=1 // pred_check
      _
    $region11: #{tpu_custom_call.1} parent=1 // pred_check_branch
      %42 = sbr.rel (0) target = $region13
    $region12: #{tpu_custom_call.1} parent=1 // pred_region
      %44 = vsyncadd [#allocation9], 0
      %s45 = sshll.u32 %s2, 4
      %s46 = int_to_ptr.hbm [resolvable:$true] %s45
      %s47 = sshll.u32 [#allocation10], 4
      %s48 = int_to_ptr.vmem [resolvable:$true] %s47
      %53 = dma.hbm_to_vmem [thread:$0]  %s46, 8192, %s48, [#allocation9], 512, 512, 32
    $region13: #{tpu_custom_call.1} parent=1 // pred_fallthru
      _
    // Predicated region
    $region14: #{tpu_custom_call.1} parent=1 // pred_check
      _
    $region15: #{tpu_custom_call.1} parent=1 // pred_check_branch
      %55 = sbr.rel (0) target = $region17
    $region16: #{tpu_custom_call.1} parent=1 // pred_region
      %57 = vsyncadd [#allocation12], 0
      %s59 = sshll.u32 %s3, 4
      %s60 = int_to_ptr.hbm [resolvable:$true] %s59
      %s61 = sshll.u32 [#allocation11], 4
      %s62 = int_to_ptr.vmem [resolvable:$true] %s61
      %64 = dma.hbm_to_vmem [thread:$0]  %s60, 64, %s62, [#allocation12]
    $region17: #{tpu_custom_call.1} parent=1 // pred_fallthru
      _
    // Predicated region
    $region18: #{tpu_custom_call.1} parent=1 // pred_check
      _
    $region19: #{tpu_custom_call.1} parent=1 // pred_check_branch
      %66 = sbr.rel (0) target = $region21
    $region20: #{tpu_custom_call.1} parent=1 // pred_region
      %68 = vsyncadd [#allocation12], 0
      %s69 = sshll.u32 %s4, 4
      %s70 = int_to_ptr.hbm [resolvable:$true] %s69
      %s71 = sshll.u32 [#allocation13], 4
      %s72 = int_to_ptr.vmem [resolvable:$true] %s71
      %77 = dma.hbm_to_vmem [thread:$0]  %s70, 2048, %s72, [#allocation12], 128, 128, 8
    $region21: #{tpu_custom_call.1} parent=1 // pred_fallthru
      _
    // Predicated region
    $region22: #{tpu_custom_call.1} parent=1 // pred_check
      _
    $region23: #{tpu_custom_call.1} parent=1 // pred_check_branch
      %79 = sbr.rel (0) target = $region25
    $region24: #{tpu_custom_call.1} parent=1 // pred_region
      _
    $region25: #{tpu_custom_call.1} parent=1 // pred_fallthru
      _
    // Predicated region
    $region26: #{tpu_custom_call.1} parent=1 // pred_check
      _
    $region27: #{tpu_custom_call.1} parent=1 // pred_check_branch
      %81 = sbr.rel (0) target = $region29
    $region28: #{tpu_custom_call.1} parent=1 // pred_region
      %83 = dma.done [#allocation6], 1024
    $region29: #{tpu_custom_call.1} parent=1 // pred_fallthru
      _
    // Predicated region
    $region30: #{tpu_custom_call.1} parent=1 // pred_check
      _
    $region31: #{tpu_custom_call.1} parent=1 // pred_check_branch
      %85 = sbr.rel (0) target = $region33
    $region32: #{tpu_custom_call.1} parent=1 // pred_region
      %87 = dma.done [#allocation9], 1024
    $region33: #{tpu_custom_call.1} parent=1 // pred_fallthru
      _
    // Predicated region
    $region34: #{tpu_custom_call.1} parent=1 // pred_check
      _
    $region35: #{tpu_custom_call.1} parent=1 // pred_check_branch
      %89 = sbr.rel (0) target = $region37
    $region36: #{tpu_custom_call.1} parent=1 // pred_region
      %91 = dma.done [#allocation9], 8192
    $region37: #{tpu_custom_call.1} parent=1 // pred_fallthru
      _
    // Predicated region
    $region38: #{tpu_custom_call.1} parent=1 // pred_check
      _
    $region39: #{tpu_custom_call.1} parent=1 // pred_check_branch
      %93 = sbr.rel (0) target = $region41
    $region40: #{tpu_custom_call.1} parent=1 // pred_region
      %95 = dma.done [#allocation12], 64
    $region41: #{tpu_custom_call.1} parent=1 // pred_fallthru
      _
    // Predicated region
    $region42: #{tpu_custom_call.1} parent=1 // pred_check
      _
    $region43: #{tpu_custom_call.1} parent=1 // pred_check_branch
      %97 = sbr.rel (0) target = $region45
    $region44: #{tpu_custom_call.1} parent=1 // pred_region
      %99 = dma.done [#allocation12], 2048
    $region45: #{tpu_custom_call.1} parent=1 // pred_fallthru
      _
    %p100 = scmp.eq.s32.totalorder 0, 0
    // Predicated region
    $region46: #{tpu_custom_call.1} parent=1 // pred_check
      %p101 = pneg %p100
    $region47: #{tpu_custom_call.1} parent=1 // pred_check_branch
      %103 = sbr.rel (%p101) target = $region49
    $region48: #{tpu_custom_call.1} parent=1 // pred_region
      %104 = vst [vmem:[#allocation3] sm:$0xff] 0.0
      %105 = vst [vmem:[#allocation4] sm:$0xff] 0.0
    $region49: #{tpu_custom_call.1} parent=1 // pred_fallthru
      _
    %v106 = vld [vmem:[#allocation5] sm:$0xff]
    %v107 = vld [vmem:[#allocation5 + $0x8] sm:$0xff]
    %v108 = vld [vmem:[#allocation5 + $0x10] sm:$0xff]
    %v109 = vld [vmem:[#allocation5 + $0x18] sm:$0xff]
    %v110 = vld [vmem:[#allocation5 + $0x20] sm:$0xff]
    %v111 = vld [vmem:[#allocation5 + $0x28] sm:$0xff]
    %v112 = vld [vmem:[#allocation5 + $0x30] sm:$0xff]
    %v113 = vld [vmem:[#allocation5 + $0x38] sm:$0xff]
    %v114 = vld [vmem:[#allocation8] sm:$0xff]
    %v115 = vld [vmem:[#allocation8 + $0x8] sm:$0xff]
    %v116 = vld [vmem:[#allocation8 + $0x10] sm:$0xff]
    %v117 = vld [vmem:[#allocation8 + $0x18] sm:$0xff]
    %v118 = vld [vmem:[#allocation8 + $0x20] sm:$0xff]
    %v119 = vld [vmem:[#allocation8 + $0x28] sm:$0xff]
    %v120 = vld [vmem:[#allocation8 + $0x30] sm:$0xff]
    %v121 = vld [vmem:[#allocation8 + $0x38] sm:$0xff]
    %v122 = vld [vmem:[#allocation11] sm:$0xf]
    %v124 = vperm.slane %v122, 0
    %v125 = vperm.slane %v122, 1
    %v126 = vperm.slane %v122, 2
    %v127 = vperm.slane %v122, 3
    %vm132 = vcmask 130048
    %v134 = vsel %vm132, %v106, 0
    %v137 = vsel %vm132, %v107, 0
    %v140 = vsel %vm132, %v108, 0
    %v143 = vsel %vm132, %v109, 0
    %v146 = vsel %vm132, %v110, 0
    %v149 = vsel %vm132, %v111, 0
    %v152 = vsel %vm132, %v112, 0
    %v155 = vsel %vm132, %v113, 0
    %157 = vmatpush.msra.mxu0 0.0
    %158 = vmatpush.msra.mxu0 0.0
    %159 = vmatpush.msra.mxu0 0.0
    %160 = vmatpush.msra.mxu0 0.0
    %161 = vmatpush.msra.mxu0 0.0
    %162 = vmatpush.msra.mxu0 0.0
    %163 = vmatpush.msra.mxu0 0.0
    %164 = vmatpush.msra.mxu0 0.0
    %165 = vmatpush.msra.mxu0 0.0
    %166 = vmatpush.msra.mxu0 0.0
    %167 = vmatpush.msra.mxu0 0.0
    %168 = vmatpush.msra.mxu0 0.0
    %169 = vmatpush.msra.mxu0 0.0
    %170 = vmatpush.msra.mxu0 0.0
    %171 = vmatpush.msra.mxu0 %v118
    %172 = vmatpush.msra.mxu0 %v114
    %173 = vmatmul.f32.gmra.mxu0 %v134
    %v174 = vpop.f32.mrf.mxu0
    %v175 = vadd.f32 %v124, %v174
    %176 = vmatmul.f32.gmra.mxu0 %v137
    %v177 = vpop.f32.mrf.mxu0
    %v178 = vadd.f32 %v124, %v177
    %179 = vmatmul.f32.gmra.mxu0 %v140
    %v180 = vpop.f32.mrf.mxu0
    %v181 = vadd.f32 %v124, %v180
    %182 = vmatmul.f32.gmra.mxu0 %v143
    %v183 = vpop.f32.mrf.mxu0
    %v184 = vadd.f32 %v124, %v183
    %185 = vmatmul.f32.gmra.mxu0 %v146
    %v186 = vpop.f32.mrf.mxu0
    %v187 = vadd.f32 %v124, %v186
    %188 = vmatmul.f32.gmra.mxu0 %v149
    %v189 = vpop.f32.mrf.mxu0
    %v190 = vadd.f32 %v124, %v189
    %191 = vmatmul.f32.gmra.mxu0 %v152
    %v192 = vpop.f32.mrf.mxu0
    %v193 = vadd.f32 %v124, %v192
    %194 = vmatmul.f32.gmra.mxu0 %v155
    %v195 = vpop.f32.mrf.mxu0
    %v196 = vadd.f32 %v124, %v195
    %197 = vdwg.mxu0
    %198 = vmatpush.msra.mxu0 0.0
    %199 = vmatpush.msra.mxu0 0.0
    %200 = vmatpush.msra.mxu0 0.0
    %201 = vmatpush.msra.mxu0 0.0
    %202 = vmatpush.msra.mxu0 0.0
    %203 = vmatpush.msra.mxu0 0.0
    %204 = vmatpush.msra.mxu0 0.0
    %205 = vmatpush.msra.mxu0 0.0
    %206 = vmatpush.msra.mxu0 0.0
    %207 = vmatpush.msra.mxu0 0.0
    %208 = vmatpush.msra.mxu0 0.0
    %209 = vmatpush.msra.mxu0 0.0
    %210 = vmatpush.msra.mxu0 0.0
    %211 = vmatpush.msra.mxu0 0.0
    %212 = vmatpush.msra.mxu0 %v119
    %213 = vmatpush.msra.mxu0 %v115
    %214 = vmatmul.f32.gmra.mxu0 %v134
    %v215 = vpop.f32.mrf.mxu0
    %v216 = vadd.f32 %v125, %v215
    %217 = vmatmul.f32.gmra.mxu0 %v137
    %v218 = vpop.f32.mrf.mxu0
    %v219 = vadd.f32 %v125, %v218
    %220 = vmatmul.f32.gmra.mxu0 %v140
    %v221 = vpop.f32.mrf.mxu0
    %v222 = vadd.f32 %v125, %v221
    %223 = vmatmul.f32.gmra.mxu0 %v143
    %v224 = vpop.f32.mrf.mxu0
    %v225 = vadd.f32 %v125, %v224
    %226 = vmatmul.f32.gmra.mxu0 %v146
    %v227 = vpop.f32.mrf.mxu0
    %v228 = vadd.f32 %v125, %v227
    %229 = vmatmul.f32.gmra.mxu0 %v149
    %v230 = vpop.f32.mrf.mxu0
    %v231 = vadd.f32 %v125, %v230
    %232 = vmatmul.f32.gmra.mxu0 %v152
    %v233 = vpop.f32.mrf.mxu0
    %v234 = vadd.f32 %v125, %v233
    %235 = vmatmul.f32.gmra.mxu0 %v155
    %v236 = vpop.f32.mrf.mxu0
    %v237 = vadd.f32 %v125, %v236
    %238 = vdwg.mxu0
    %239 = vmatpush.msra.mxu0 0.0
    %240 = vmatpush.msra.mxu0 0.0
    %241 = vmatpush.msra.mxu0 0.0
    %242 = vmatpush.msra.mxu0 0.0
    %243 = vmatpush.msra.mxu0 0.0
    %244 = vmatpush.msra.mxu0 0.0
    %245 = vmatpush.msra.mxu0 0.0
    %246 = vmatpush.msra.mxu0 0.0
    %247 = vmatpush.msra.mxu0 0.0
    %248 = vmatpush.msra.mxu0 0.0
    %249 = vmatpush.msra.mxu0 0.0
    %250 = vmatpush.msra.mxu0 0.0
    %251 = vmatpush.msra.mxu0 0.0
    %252 = vmatpush.msra.mxu0 0.0
    %253 = vmatpush.msra.mxu0 %v120
    %254 = vmatpush.msra.mxu0 %v116
    %255 = vmatmul.f32.gmra.mxu0 %v134
    %v256 = vpop.f32.mrf.mxu0
    %v257 = vadd.f32 %v126, %v256
    %258 = vmatmul.f32.gmra.mxu0 %v137
    %v259 = vpop.f32.mrf.mxu0
    %v260 = vadd.f32 %v126, %v259
    %261 = vmatmul.f32.gmra.mxu0 %v140
    %v262 = vpop.f32.mrf.mxu0
    %v263 = vadd.f32 %v126, %v262
    %264 = vmatmul.f32.gmra.mxu0 %v143
    %v265 = vpop.f32.mrf.mxu0
    %v266 = vadd.f32 %v126, %v265
    %267 = vmatmul.f32.gmra.mxu0 %v146
    %v268 = vpop.f32.mrf.mxu0
    %v269 = vadd.f32 %v126, %v268
    %270 = vmatmul.f32.gmra.mxu0 %v149
    %v271 = vpop.f32.mrf.mxu0
    %v272 = vadd.f32 %v126, %v271
    %273 = vmatmul.f32.gmra.mxu0 %v152
    %v274 = vpop.f32.mrf.mxu0
    %v275 = vadd.f32 %v126, %v274
    %276 = vmatmul.f32.gmra.mxu0 %v155
    %v277 = vpop.f32.mrf.mxu0
    %v278 = vadd.f32 %v126, %v277
    %279 = vdwg.mxu0
    %280 = vmatpush.msra.mxu0 0.0
    %281 = vmatpush.msra.mxu0 0.0
    %282 = vmatpush.msra.mxu0 0.0
    %283 = vmatpush.msra.mxu0 0.0
    %284 = vmatpush.msra.mxu0 0.0
    %285 = vmatpush.msra.mxu0 0.0
    %286 = vmatpush.msra.mxu0 0.0
    %287 = vmatpush.msra.mxu0 0.0
    %288 = vmatpush.msra.mxu0 0.0
    %289 = vmatpush.msra.mxu0 0.0
    %290 = vmatpush.msra.mxu0 0.0
    %291 = vmatpush.msra.mxu0 0.0
    %292 = vmatpush.msra.mxu0 0.0
    %293 = vmatpush.msra.mxu0 0.0
    %294 = vmatpush.msra.mxu0 %v121
    %295 = vmatpush.msra.mxu0 %v117
    %296 = vmatmul.f32.gmra.mxu0 %v134
    %v297 = vpop.f32.mrf.mxu0
    %v298 = vadd.f32 %v127, %v297
    %299 = vmatmul.f32.gmra.mxu0 %v137
    %v300 = vpop.f32.mrf.mxu0
    %v301 = vadd.f32 %v127, %v300
    %302 = vmatmul.f32.gmra.mxu0 %v140
    %v303 = vpop.f32.mrf.mxu0
    %v304 = vadd.f32 %v127, %v303
    %305 = vmatmul.f32.gmra.mxu0 %v143
    %v306 = vpop.f32.mrf.mxu0
    %v307 = vadd.f32 %v127, %v306
    %308 = vmatmul.f32.gmra.mxu0 %v146
    %v309 = vpop.f32.mrf.mxu0
    %v310 = vadd.f32 %v127, %v309
    %311 = vmatmul.f32.gmra.mxu0 %v149
    %v312 = vpop.f32.mrf.mxu0
    %v313 = vadd.f32 %v127, %v312
    %314 = vmatmul.f32.gmra.mxu0 %v152
    %v315 = vpop.f32.mrf.mxu0
    %v316 = vadd.f32 %v127, %v315
    %317 = vmatmul.f32.gmra.mxu0 %v155
    %v318 = vpop.f32.mrf.mxu0
    %v319 = vadd.f32 %v127, %v318
    %320 = vdwg.mxu0
    %321 = vst [vmem:[#allocation2] sm:$0xff] %v175
    %322 = vst [vmem:[#allocation2 + $0x8] sm:$0xff] %v216
    %323 = vst [vmem:[#allocation2 + $0x10] sm:$0xff] %v257
    %324 = vst [vmem:[#allocation2 + $0x18] sm:$0xff] %v298
    %325 = vst [vmem:[#allocation2 + $0x20] sm:$0xff] %v178
    %326 = vst [vmem:[#allocation2 + $0x28] sm:$0xff] %v219
    %327 = vst [vmem:[#allocation2 + $0x30] sm:$0xff] %v260
    %328 = vst [vmem:[#allocation2 + $0x38] sm:$0xff] %v301
    %329 = vst [vmem:[#allocation2 + $0x40] sm:$0xff] %v181
    %330 = vst [vmem:[#allocation2 + $0x48] sm:$0xff] %v222
    %331 = vst [vmem:[#allocation2 + $0x50] sm:$0xff] %v263
    %332 = vst [vmem:[#allocation2 + $0x58] sm:$0xff] %v304
    %333 = vst [vmem:[#allocation2 + $0x60] sm:$0xff] %v184
    %334 = vst [vmem:[#allocation2 + $0x68] sm:$0xff] %v225
    %335 = vst [vmem:[#allocation2 + $0x70] sm:$0xff] %v266
    %336 = vst [vmem:[#allocation2 + $0x78] sm:$0xff] %v307
    %337 = vst [vmem:[#allocation2 + $0x80] sm:$0xff] %v187
    %338 = vst [vmem:[#allocation2 + $0x88] sm:$0xff] %v228
    %339 = vst [vmem:[#allocation2 + $0x90] sm:$0xff] %v269
    %340 = vst [vmem:[#allocation2 + $0x98] sm:$0xff] %v310
    %341 = vst [vmem:[#allocation2 + $0xa0] sm:$0xff] %v190
    %342 = vst [vmem:[#allocation2 + $0xa8] sm:$0xff] %v231
    %343 = vst [vmem:[#allocation2 + $0xb0] sm:$0xff] %v272
    %344 = vst [vmem:[#allocation2 + $0xb8] sm:$0xff] %v313
    %345 = vst [vmem:[#allocation2 + $0xc0] sm:$0xff] %v193
    %346 = vst [vmem:[#allocation2 + $0xc8] sm:$0xff] %v234
    %347 = vst [vmem:[#allocation2 + $0xd0] sm:$0xff] %v275
    %348 = vst [vmem:[#allocation2 + $0xd8] sm:$0xff] %v316
    %349 = vst [vmem:[#allocation2 + $0xe0] sm:$0xff] %v196
    %350 = vst [vmem:[#allocation2 + $0xe8] sm:$0xff] %v237
    %351 = vst [vmem:[#allocation2 + $0xf0] sm:$0xff] %v278
    %352 = vst [vmem:[#allocation2 + $0xf8] sm:$0xff] %v319
    %v353 = vld [vmem:[#allocation10] sm:$0xff]
    %v354 = vld [vmem:[#allocation10 + $0x8] sm:$0xff]
    %v355 = vld [vmem:[#allocation10 + $0x10] sm:$0xff]
    %v356 = vld [vmem:[#allocation10 + $0x18] sm:$0xff]
    %v357 = vld [vmem:[#allocation10 + $0x20] sm:$0xff]
    %v358 = vld [vmem:[#allocation10 + $0x28] sm:$0xff]
    %v359 = vld [vmem:[#allocation10 + $0x30] sm:$0xff]
    %v360 = vld [vmem:[#allocation10 + $0x38] sm:$0xff]
    %v361 = vld [vmem:[#allocation10 + $0x40] sm:$0xff]
    %v362 = vld [vmem:[#allocation10 + $0x48] sm:$0xff]
    %v363 = vld [vmem:[#allocation10 + $0x50] sm:$0xff]
    %v364 = vld [vmem:[#allocation10 + $0x58] sm:$0xff]
    %v365 = vld [vmem:[#allocation10 + $0x60] sm:$0xff]
    %v366 = vld [vmem:[#allocation10 + $0x68] sm:$0xff]
    %v367 = vld [vmem:[#allocation10 + $0x70] sm:$0xff]
    %v368 = vld [vmem:[#allocation10 + $0x78] sm:$0xff]
    %v369 = vld [vmem:[#allocation10 + $0x80] sm:$0xff]
    %v370 = vld [vmem:[#allocation10 + $0x88] sm:$0xff]
    %v371 = vld [vmem:[#allocation10 + $0x90] sm:$0xff]
    %v372 = vld [vmem:[#allocation10 + $0x98] sm:$0xff]
    %v373 = vld [vmem:[#allocation10 + $0xa0] sm:$0xff]
    %v374 = vld [vmem:[#allocation10 + $0xa8] sm:$0xff]
    %v375 = vld [vmem:[#allocation10 + $0xb0] sm:$0xff]
    %v376 = vld [vmem:[#allocation10 + $0xb8] sm:$0xff]
    %v377 = vld [vmem:[#allocation10 + $0xc0] sm:$0xff]
    %v378 = vld [vmem:[#allocation10 + $0xc8] sm:$0xff]
    %v379 = vld [vmem:[#allocation10 + $0xd0] sm:$0xff]
    %v380 = vld [vmem:[#allocation10 + $0xd8] sm:$0xff]
    %v381 = vld [vmem:[#allocation10 + $0xe0] sm:$0xff]
    %v382 = vld [vmem:[#allocation10 + $0xe8] sm:$0xff]
    %v383 = vld [vmem:[#allocation10 + $0xf0] sm:$0xff]
    %v384 = vld [vmem:[#allocation10 + $0xf8] sm:$0xff]
    %v385 = vld [vmem:[#allocation10 + $0x100] sm:$0xff]
    %v386 = vld [vmem:[#allocation10 + $0x108] sm:$0xff]
    %v387 = vld [vmem:[#allocation10 + $0x110] sm:$0xff]
    %v388 = vld [vmem:[#allocation10 + $0x118] sm:$0xff]
    %v389 = vld [vmem:[#allocation10 + $0x120] sm:$0xff]
    %v390 = vld [vmem:[#allocation10 + $0x128] sm:$0xff]
    %v391 = vld [vmem:[#allocation10 + $0x130] sm:$0xff]
    %v392 = vld [vmem:[#allocation10 + $0x138] sm:$0xff]
    %v393 = vld [vmem:[#allocation10 + $0x140] sm:$0xff]
    %v394 = vld [vmem:[#allocation10 + $0x148] sm:$0xff]
    %v395 = vld [vmem:[#allocation10 + $0x150] sm:$0xff]
    %v396 = vld [vmem:[#allocation10 + $0x158] sm:$0xff]
    %v397 = vld [vmem:[#allocation10 + $0x160] sm:$0xff]
    %v398 = vld [vmem:[#allocation10 + $0x168] sm:$0xff]
    %v399 = vld [vmem:[#allocation10 + $0x170] sm:$0xff]
    %v400 = vld [vmem:[#allocation10 + $0x178] sm:$0xff]
    %v401 = vld [vmem:[#allocation10 + $0x180] sm:$0xff]
    %v402 = vld [vmem:[#allocation10 + $0x188] sm:$0xff]
    %v403 = vld [vmem:[#allocation10 + $0x190] sm:$0xff]
    %v404 = vld [vmem:[#allocation10 + $0x198] sm:$0xff]
    %v405 = vld [vmem:[#allocation10 + $0x1a0] sm:$0xff]
    %v406 = vld [vmem:[#allocation10 + $0x1a8] sm:$0xff]
    %v407 = vld [vmem:[#allocation10 + $0x1b0] sm:$0xff]
    %v408 = vld [vmem:[#allocation10 + $0x1b8] sm:$0xff]
    %v409 = vld [vmem:[#allocation10 + $0x1c0] sm:$0xff]
    %v410 = vld [vmem:[#allocation10 + $0x1c8] sm:$0xff]
    %v411 = vld [vmem:[#allocation10 + $0x1d0] sm:$0xff]
    %v412 = vld [vmem:[#allocation10 + $0x1d8] sm:$0xff]
    %v413 = vld [vmem:[#allocation10 + $0x1e0] sm:$0xff]
    %v414 = vld [vmem:[#allocation10 + $0x1e8] sm:$0xff]
    %v415 = vld [vmem:[#allocation10 + $0x1f0] sm:$0xff]
    %v416 = vld [vmem:[#allocation10 + $0x1f8] sm:$0xff]
    %v417 = vld [vmem:[#allocation3] sm:$0xff]
    %v418 = vld [vmem:[#allocation4] sm:$0xff]
    %s419 = smul.u32 0, 4
    %s420 = smul.addr %s419, 8
    %s421 = scalar_lea.vmem [#allocation2], %s420
    %v422 = vld [vmem:[%s421] sm:$0xff]
    %v423 = vld [vmem:[%s421 + $0x8] sm:$0xff]
    %v424 = vld [vmem:[%s421 + $0x10] sm:$0xff]
    %v425 = vld [vmem:[%s421 + $0x18] sm:$0xff]
    %426 = vmatpush.msra.mxu0 %v413
    %427 = vmatpush.msra.mxu0 %v409
    %428 = vmatpush.msra.mxu0 %v405
    %429 = vmatpush.msra.mxu0 %v401
    %430 = vmatpush.msra.mxu0 %v397
    %431 = vmatpush.msra.mxu0 %v393
    %432 = vmatpush.msra.mxu0 %v389
    %433 = vmatpush.msra.mxu0 %v385
    %434 = vmatpush.msra.mxu0 %v381
    %435 = vmatpush.msra.mxu0 %v377
    %436 = vmatpush.msra.mxu0 %v373
    %437 = vmatpush.msra.mxu0 %v369
    %438 = vmatpush.msra.mxu0 %v365
    %439 = vmatpush.msra.mxu0 %v361
    %440 = vmatpush.msra.mxu0 %v357
    %441 = vmatpush.msra.mxu0 %v353
    %442 = vmatmul.f32.gmra.mxu0 %v417
    %v443 = vpop.f32.mrf.mxu0
    %v444 = vadd.f32 0.0, %v443
    %445 = vdwg.mxu0
    %446 = vmatpush.msra.mxu0 %v414
    %447 = vmatpush.msra.mxu0 %v410
    %448 = vmatpush.msra.mxu0 %v406
    %449 = vmatpush.msra.mxu0 %v402
    %450 = vmatpush.msra.mxu0 %v398
    %451 = vmatpush.msra.mxu0 %v394
    %452 = vmatpush.msra.mxu0 %v390
    %453 = vmatpush.msra.mxu0 %v386
    %454 = vmatpush.msra.mxu0 %v382
    %455 = vmatpush.msra.mxu0 %v378
    %456 = vmatpush.msra.mxu0 %v374
    %457 = vmatpush.msra.mxu0 %v370
    %458 = vmatpush.msra.mxu0 %v366
    %459 = vmatpush.msra.mxu0 %v362
    %460 = vmatpush.msra.mxu0 %v358
    %461 = vmatpush.msra.mxu0 %v354
    %462 = vmatmul.f32.gmra.mxu0 %v417
    %v463 = vpop.f32.mrf.mxu0
    %v464 = vadd.f32 0.0, %v463
    %465 = vdwg.mxu0
    %466 = vmatpush.msra.mxu0 %v415
    %467 = vmatpush.msra.mxu0 %v411
    %468 = vmatpush.msra.mxu0 %v407
    %469 = vmatpush.msra.mxu0 %v403
    %470 = vmatpush.msra.mxu0 %v399
    %471 = vmatpush.msra.mxu0 %v395
    %472 = vmatpush.msra.mxu0 %v391
    %473 = vmatpush.msra.mxu0 %v387
    %474 = vmatpush.msra.mxu0 %v383
    %475 = vmatpush.msra.mxu0 %v379
    %476 = vmatpush.msra.mxu0 %v375
    %477 = vmatpush.msra.mxu0 %v371
    %478 = vmatpush.msra.mxu0 %v367
    %479 = vmatpush.msra.mxu0 %v363
    %480 = vmatpush.msra.mxu0 %v359
    %481 = vmatpush.msra.mxu0 %v355
    %482 = vmatmul.f32.gmra.mxu0 %v417
    %v483 = vpop.f32.mrf.mxu0
    %v484 = vadd.f32 0.0, %v483
    %485 = vdwg.mxu0
    %486 = vmatpush.msra.mxu0 %v416
    %487 = vmatpush.msra.mxu0 %v412
    %488 = vmatpush.msra.mxu0 %v408
    %489 = vmatpush.msra.mxu0 %v404
    %490 = vmatpush.msra.mxu0 %v400
    %491 = vmatpush.msra.mxu0 %v396
    %492 = vmatpush.msra.mxu0 %v392
    %493 = vmatpush.msra.mxu0 %v388
    %494 = vmatpush.msra.mxu0 %v384
    %495 = vmatpush.msra.mxu0 %v380
    %496 = vmatpush.msra.mxu0 %v376
    %497 = vmatpush.msra.mxu0 %v372
    %498 = vmatpush.msra.mxu0 %v368
    %499 = vmatpush.msra.mxu0 %v364
    %500 = vmatpush.msra.mxu0 %v360
    %501 = vmatpush.msra.mxu0 %v356
    %502 = vmatmul.f32.gmra.mxu0 %v417
    %v503 = vpop.f32.mrf.mxu0
    %v504 = vadd.f32 0.0, %v503
    %505 = vdwg.mxu0
    %v506 = vadd.f32 %v422, %v444
    %v507 = vadd.f32 %v423, %v464
    %v508 = vadd.f32 %v424, %v484
    %v509 = vadd.f32 %v425, %v504
    %v510 = vxor.u32 %v506, 2147483648
    %v511 = vmul.f32 %v510, 1.442695
    %v512 = vpow.pop %v511
    %v513 = vadd.f32 %v512, 1.0
    %v514 = vrcp.pop %v513
    %v515 = vmul.f32 %v513, %v514
    %v516 = vsub.f32 1.0, %v515
    %v517 = vmul.f32 %v514, %v516
    %v518 = vadd.f32 %v514, %v517
    %vm519 = vweird.f32 %v513
    %vm520 = vweird.f32 %v514
    %vm521 = vmor %vm519, %vm520
    %v522 = vsel %vm521, %v514, %v518
    %v523 = vand.u32 2147483647, %v513
    %vm524 = vcmp.eq.f32.partialorder %v523, 8.507059e+37
    %v525 = vand.u32 %v513, 2147483648
    %v526 = vor.u32 1.1754944e-38, %v525
    %v527 = vsel %vm524, %v526, %v522
    %v528 = vmul.f32 1.0, %v527
    %v529 = vxor.u32 %v507, 2147483648
    %v530 = vmul.f32 %v529, 1.442695
    %v531 = vpow.pop %v530
    %v532 = vadd.f32 %v531, 1.0
    %v533 = vrcp.pop %v532
    %v534 = vmul.f32 %v532, %v533
    %v535 = vsub.f32 1.0, %v534
    %v536 = vmul.f32 %v533, %v535
    %v537 = vadd.f32 %v533, %v536
    %vm538 = vweird.f32 %v532
    %vm539 = vweird.f32 %v533
    %vm540 = vmor %vm538, %vm539
    %v541 = vsel %vm540, %v533, %v537
    %v542 = vand.u32 2147483647, %v532
    %vm543 = vcmp.eq.f32.partialorder %v542, 8.507059e+37
    %v544 = vand.u32 %v532, 2147483648
    %v545 = vor.u32 1.1754944e-38, %v544
    %v546 = vsel %vm543, %v545, %v541
    %v547 = vmul.f32 1.0, %v546
    %v548 = vtanh.pop %v508
    %v549 = vxor.u32 %v509, 2147483648
    %v550 = vmul.f32 %v549, 1.442695
    %v551 = vpow.pop %v550
    %v552 = vadd.f32 %v551, 1.0
    %v553 = vrcp.pop %v552
    %v554 = vmul.f32 %v552, %v553
    %v555 = vsub.f32 1.0, %v554
    %v556 = vmul.f32 %v553, %v555
    %v557 = vadd.f32 %v553, %v556
    %vm558 = vweird.f32 %v552
    %vm559 = vweird.f32 %v553
    %vm560 = vmor %vm558, %vm559
    %v561 = vsel %vm560, %v553, %v557
    %v562 = vand.u32 2147483647, %v552
    %vm563 = vcmp.eq.f32.partialorder %v562, 8.507059e+37
    %v564 = vand.u32 %v552, 2147483648
    %v565 = vor.u32 1.1754944e-38, %v564
    %v566 = vsel %vm563, %v565, %v561
    %v567 = vmul.f32 1.0, %v566
    %v568 = vmul.f32 %v547, %v418
    %v569 = vmul.f32 %v528, %v548
    %v570 = vadd.f32 %v568, %v569
    %v571 = vtanh.pop %v570
    %v572 = vmul.f32 %v567, %v571
    %s573 = smul.u32 1, 4
    %s574 = smul.addr %s573, 8
    %s575 = scalar_lea.vmem [#allocation2], %s574
    %v576 = vld [vmem:[%s575] sm:$0xff]
    %v577 = vld [vmem:[%s575 + $0x8] sm:$0xff]
    %v578 = vld [vmem:[%s575 + $0x10] sm:$0xff]
    %v579 = vld [vmem:[%s575 + $0x18] sm:$0xff]
    %580 = vmatpush.msra.mxu0 %v413
    %581 = vmatpush.msra.mxu0 %v409
    %582 = vmatpush.msra.mxu0 %v405
    %583 = vmatpush.msra.mxu0 %v401
    %584 = vmatpush.msra.mxu0 %v397
    %585 = vmatpush.msra.mxu0 %v393
    %586 = vmatpush.msra.mxu0 %v389
    %587 = vmatpush.msra.mxu0 %v385
    %588 = vmatpush.msra.mxu0 %v381
    %589 = vmatpush.msra.mxu0 %v377
    %590 = vmatpush.msra.mxu0 %v373
    %591 = vmatpush.msra.mxu0 %v369
    %592 = vmatpush.msra.mxu0 %v365
    %593 = vmatpush.msra.mxu0 %v361
    %594 = vmatpush.msra.mxu0 %v357
    %595 = vmatpush.msra.mxu0 %v353
    %596 = vmatmul.f32.gmra.mxu0 %v572
    %v597 = vpop.f32.mrf.mxu0
    %v598 = vadd.f32 0.0, %v597
    %599 = vdwg.mxu0
    %600 = vmatpush.msra.mxu0 %v414
    %601 = vmatpush.msra.mxu0 %v410
    %602 = vmatpush.msra.mxu0 %v406
    %603 = vmatpush.msra.mxu0 %v402
    %604 = vmatpush.msra.mxu0 %v398
    %605 = vmatpush.msra.mxu0 %v394
    %606 = vmatpush.msra.mxu0 %v390
    %607 = vmatpush.msra.mxu0 %v386
    %608 = vmatpush.msra.mxu0 %v382
    %609 = vmatpush.msra.mxu0 %v378
    %610 = vmatpush.msra.mxu0 %v374
    %611 = vmatpush.msra.mxu0 %v370
    %612 = vmatpush.msra.mxu0 %v366
    %613 = vmatpush.msra.mxu0 %v362
    %614 = vmatpush.msra.mxu0 %v358
    %615 = vmatpush.msra.mxu0 %v354
    %616 = vmatmul.f32.gmra.mxu0 %v572
    %v617 = vpop.f32.mrf.mxu0
    %v618 = vadd.f32 0.0, %v617
    %619 = vdwg.mxu0
    %620 = vmatpush.msra.mxu0 %v415
    %621 = vmatpush.msra.mxu0 %v411
    %622 = vmatpush.msra.mxu0 %v407
    %623 = vmatpush.msra.mxu0 %v403
    %624 = vmatpush.msra.mxu0 %v399
    %625 = vmatpush.msra.mxu0 %v395
    %626 = vmatpush.msra.mxu0 %v391
    %627 = vmatpush.msra.mxu0 %v387
    %628 = vmatpush.msra.mxu0 %v383
    %629 = vmatpush.msra.mxu0 %v379
    %630 = vmatpush.msra.mxu0 %v375
    %631 = vmatpush.msra.mxu0 %v371
    %632 = vmatpush.msra.mxu0 %v367
    %633 = vmatpush.msra.mxu0 %v363
    %634 = vmatpush.msra.mxu0 %v359
    %635 = vmatpush.msra.mxu0 %v355
    %636 = vmatmul.f32.gmra.mxu0 %v572
    %v637 = vpop.f32.mrf.mxu0
    %v638 = vadd.f32 0.0, %v637
    %639 = vdwg.mxu0
    %640 = vmatpush.msra.mxu0 %v416
    %641 = vmatpush.msra.mxu0 %v412
    %642 = vmatpush.msra.mxu0 %v408
    %643 = vmatpush.msra.mxu0 %v404
    %644 = vmatpush.msra.mxu0 %v400
    %645 = vmatpush.msra.mxu0 %v396
    %646 = vmatpush.msra.mxu0 %v392
    %647 = vmatpush.msra.mxu0 %v388
    %648 = vmatpush.msra.mxu0 %v384
    %649 = vmatpush.msra.mxu0 %v380
    %650 = vmatpush.msra.mxu0 %v376
    %651 = vmatpush.msra.mxu0 %v372
    %652 = vmatpush.msra.mxu0 %v368
    %653 = vmatpush.msra.mxu0 %v364
    %654 = vmatpush.msra.mxu0 %v360
    %655 = vmatpush.msra.mxu0 %v356
    %656 = vmatmul.f32.gmra.mxu0 %v572
    %v657 = vpop.f32.mrf.mxu0
    %v658 = vadd.f32 0.0, %v657
    %659 = vdwg.mxu0
    %v660 = vadd.f32 %v576, %v598
    %v661 = vadd.f32 %v577, %v618
    %v662 = vadd.f32 %v578, %v638
    %v663 = vadd.f32 %v579, %v658
    %v664 = vxor.u32 %v660, 2147483648
    %v665 = vmul.f32 %v664, 1.442695
    %v666 = vpow.pop %v665
    %v667 = vadd.f32 %v666, 1.0
    %v668 = vrcp.pop %v667
    %v669 = vmul.f32 %v667, %v668
    %v670 = vsub.f32 1.0, %v669
    %v671 = vmul.f32 %v668, %v670
    %v672 = vadd.f32 %v668, %v671
    %vm673 = vweird.f32 %v667
    %vm674 = vweird.f32 %v668
    %vm675 = vmor %vm673, %vm674
    %v676 = vsel %vm675, %v668, %v672
    %v677 = vand.u32 2147483647, %v667
    %vm678 = vcmp.eq.f32.partialorder %v677, 8.507059e+37
    %v679 = vand.u32 %v667, 2147483648
    %v680 = vor.u32 1.1754944e-38, %v679
    %v681 = vsel %vm678, %v680, %v676
    %v682 = vmul.f32 1.0, %v681
    %v683 = vxor.u32 %v661, 2147483648
    %v684 = vmul.f32 %v683, 1.442695
    %v685 = vpow.pop %v684
    %v686 = vadd.f32 %v685, 1.0
    %v687 = vrcp.pop %v686
    %v688 = vmul.f32 %v686, %v687
    %v689 = vsub.f32 1.0, %v688
    %v690 = vmul.f32 %v687, %v689
    %v691 = vadd.f32 %v687, %v690
    %vm692 = vweird.f32 %v686
    %vm693 = vweird.f32 %v687
    %vm694 = vmor %vm692, %vm693
    %v695 = vsel %vm694, %v687, %v691
    %v696 = vand.u32 2147483647, %v686
    %vm697 = vcmp.eq.f32.partialorder %v696, 8.507059e+37
    %v698 = vand.u32 %v686, 2147483648
    %v699 = vor.u32 1.1754944e-38, %v698
    %v700 = vsel %vm697, %v699, %v695
    %v701 = vmul.f32 1.0, %v700
    %v702 = vtanh.pop %v662
    %v703 = vxor.u32 %v663, 2147483648
    %v704 = vmul.f32 %v703, 1.442695
    %v705 = vpow.pop %v704
    %v706 = vadd.f32 %v705, 1.0
    %v707 = vrcp.pop %v706
    %v708 = vmul.f32 %v706, %v707
    %v709 = vsub.f32 1.0, %v708
    %v710 = vmul.f32 %v707, %v709
    %v711 = vadd.f32 %v707, %v710
    %vm712 = vweird.f32 %v706
    %vm713 = vweird.f32 %v707
    %vm714 = vmor %vm712, %vm713
    %v715 = vsel %vm714, %v707, %v711
    %v716 = vand.u32 2147483647, %v706
    %vm717 = vcmp.eq.f32.partialorder %v716, 8.507059e+37
    %v718 = vand.u32 %v706, 2147483648
    %v719 = vor.u32 1.1754944e-38, %v718
    %v720 = vsel %vm717, %v719, %v715
    %v721 = vmul.f32 1.0, %v720
    %v722 = vmul.f32 %v701, %v570
    %v723 = vmul.f32 %v682, %v702
    %v724 = vadd.f32 %v722, %v723
    %v725 = vtanh.pop %v724
    %v726 = vmul.f32 %v721, %v725
    %s727 = smul.u32 2, 4
    %s728 = smul.addr %s727, 8
    %s729 = scalar_lea.vmem [#allocation2], %s728
    %v730 = vld [vmem:[%s729] sm:$0xff]
    %v731 = vld [vmem:[%s729 + $0x8] sm:$0xff]
    %v732 = vld [vmem:[%s729 + $0x10] sm:$0xff]
    %v733 = vld [vmem:[%s729 + $0x18] sm:$0xff]
    %734 = vmatpush.msra.mxu0 %v413
    %735 = vmatpush.msra.mxu0 %v409
    %736 = vmatpush.msra.mxu0 %v405
    %737 = vmatpush.msra.mxu0 %v401
    %738 = vmatpush.msra.mxu0 %v397
    %739 = vmatpush.msra.mxu0 %v393
    %740 = vmatpush.msra.mxu0 %v389
    %741 = vmatpush.msra.mxu0 %v385
    %742 = vmatpush.msra.mxu0 %v381
    %743 = vmatpush.msra.mxu0 %v377
    %744 = vmatpush.msra.mxu0 %v373
    %745 = vmatpush.msra.mxu0 %v369
    %746 = vmatpush.msra.mxu0 %v365
    %747 = vmatpush.msra.mxu0 %v361
    %748 = vmatpush.msra.mxu0 %v357
    %749 = vmatpush.msra.mxu0 %v353
    %750 = vmatmul.f32.gmra.mxu0 %v726
    %v751 = vpop.f32.mrf.mxu0
    %v752 = vadd.f32 0.0, %v751
    %753 = vdwg.mxu0
    %754 = vmatpush.msra.mxu0 %v414
    %755 = vmatpush.msra.mxu0 %v410
    %756 = vmatpush.msra.mxu0 %v406
    %757 = vmatpush.msra.mxu0 %v402
    %758 = vmatpush.msra.mxu0 %v398
    %759 = vmatpush.msra.mxu0 %v394
    %760 = vmatpush.msra.mxu0 %v390
    %761 = vmatpush.msra.mxu0 %v386
    %762 = vmatpush.msra.mxu0 %v382
    %763 = vmatpush.msra.mxu0 %v378
    %764 = vmatpush.msra.mxu0 %v374
    %765 = vmatpush.msra.mxu0 %v370
    %766 = vmatpush.msra.mxu0 %v366
    %767 = vmatpush.msra.mxu0 %v362
    %768 = vmatpush.msra.mxu0 %v358
    %769 = vmatpush.msra.mxu0 %v354
    %770 = vmatmul.f32.gmra.mxu0 %v726
    %v771 = vpop.f32.mrf.mxu0
    %v772 = vadd.f32 0.0, %v771
    %773 = vdwg.mxu0
    %774 = vmatpush.msra.mxu0 %v415
    %775 = vmatpush.msra.mxu0 %v411
    %776 = vmatpush.msra.mxu0 %v407
    %777 = vmatpush.msra.mxu0 %v403
    %778 = vmatpush.msra.mxu0 %v399
    %779 = vmatpush.msra.mxu0 %v395
    %780 = vmatpush.msra.mxu0 %v391
    %781 = vmatpush.msra.mxu0 %v387
    %782 = vmatpush.msra.mxu0 %v383
    %783 = vmatpush.msra.mxu0 %v379
    %784 = vmatpush.msra.mxu0 %v375
    %785 = vmatpush.msra.mxu0 %v371
    %786 = vmatpush.msra.mxu0 %v367
    %787 = vmatpush.msra.mxu0 %v363
    %788 = vmatpush.msra.mxu0 %v359
    %789 = vmatpush.msra.mxu0 %v355
    %790 = vmatmul.f32.gmra.mxu0 %v726
    %v791 = vpop.f32.mrf.mxu0
    %v792 = vadd.f32 0.0, %v791
    %793 = vdwg.mxu0
    %794 = vmatpush.msra.mxu0 %v416
    %795 = vmatpush.msra.mxu0 %v412
    %796 = vmatpush.msra.mxu0 %v408
    %797 = vmatpush.msra.mxu0 %v404
    %798 = vmatpush.msra.mxu0 %v400
    %799 = vmatpush.msra.mxu0 %v396
    %800 = vmatpush.msra.mxu0 %v392
    %801 = vmatpush.msra.mxu0 %v388
    %802 = vmatpush.msra.mxu0 %v384
    %803 = vmatpush.msra.mxu0 %v380
    %804 = vmatpush.msra.mxu0 %v376
    %805 = vmatpush.msra.mxu0 %v372
    %806 = vmatpush.msra.mxu0 %v368
    %807 = vmatpush.msra.mxu0 %v364
    %808 = vmatpush.msra.mxu0 %v360
    %809 = vmatpush.msra.mxu0 %v356
    %810 = vmatmul.f32.gmra.mxu0 %v726
    %v811 = vpop.f32.mrf.mxu0
    %v812 = vadd.f32 0.0, %v811
    %813 = vdwg.mxu0
    %v814 = vadd.f32 %v730, %v752
    %v815 = vadd.f32 %v731, %v772
    %v816 = vadd.f32 %v732, %v792
    %v817 = vadd.f32 %v733, %v812
    %v818 = vxor.u32 %v814, 2147483648
    %v819 = vmul.f32 %v818, 1.442695
    %v820 = vpow.pop %v819
    %v821 = vadd.f32 %v820, 1.0
    %v822 = vrcp.pop %v821
    %v823 = vmul.f32 %v821, %v822
    %v824 = vsub.f32 1.0, %v823
    %v825 = vmul.f32 %v822, %v824
    %v826 = vadd.f32 %v822, %v825
    %vm827 = vweird.f32 %v821
    %vm828 = vweird.f32 %v822
    %vm829 = vmor %vm827, %vm828
    %v830 = vsel %vm829, %v822, %v826
    %v831 = vand.u32 2147483647, %v821
    %vm832 = vcmp.eq.f32.partialorder %v831, 8.507059e+37
    %v833 = vand.u32 %v821, 2147483648
    %v834 = vor.u32 1.1754944e-38, %v833
    %v835 = vsel %vm832, %v834, %v830
    %v836 = vmul.f32 1.0, %v835
    %v837 = vxor.u32 %v815, 2147483648
    %v838 = vmul.f32 %v837, 1.442695
    %v839 = vpow.pop %v838
    %v840 = vadd.f32 %v839, 1.0
    %v841 = vrcp.pop %v840
    %v842 = vmul.f32 %v840, %v841
    %v843 = vsub.f32 1.0, %v842
    %v844 = vmul.f32 %v841, %v843
    %v845 = vadd.f32 %v841, %v844
    %vm846 = vweird.f32 %v840
    %vm847 = vweird.f32 %v841
    %vm848 = vmor %vm846, %vm847
    %v849 = vsel %vm848, %v841, %v845
    %v850 = vand.u32 2147483647, %v840
    %vm851 = vcmp.eq.f32.partialorder %v850, 8.507059e+37
    %v852 = vand.u32 %v840, 2147483648
    %v853 = vor.u32 1.1754944e-38, %v852
    %v854 = vsel %vm851, %v853, %v849
    %v855 = vmul.f32 1.0, %v854
    %v856 = vtanh.pop %v816
    %v857 = vxor.u32 %v817, 2147483648
    %v858 = vmul.f32 %v857, 1.442695
    %v859 = vpow.pop %v858
    %v860 = vadd.f32 %v859, 1.0
    %v861 = vrcp.pop %v860
    %v862 = vmul.f32 %v860, %v861
    %v863 = vsub.f32 1.0, %v862
    %v864 = vmul.f32 %v861, %v863
    %v865 = vadd.f32 %v861, %v864
    %vm866 = vweird.f32 %v860
    %vm867 = vweird.f32 %v861
    %vm868 = vmor %vm866, %vm867
    %v869 = vsel %vm868, %v861, %v865
    %v870 = vand.u32 2147483647, %v860
    %vm871 = vcmp.eq.f32.partialorder %v870, 8.507059e+37
    %v872 = vand.u32 %v860, 2147483648
    %v873 = vor.u32 1.1754944e-38, %v872
    %v874 = vsel %vm871, %v873, %v869
    %v875 = vmul.f32 1.0, %v874
    %v876 = vmul.f32 %v855, %v724
    %v877 = vmul.f32 %v836, %v856
    %v878 = vadd.f32 %v876, %v877
    %v879 = vtanh.pop %v878
    %v880 = vmul.f32 %v875, %v879
    %s881 = smul.u32 3, 4
    %s882 = smul.addr %s881, 8
    %s883 = scalar_lea.vmem [#allocation2], %s882
    %v884 = vld [vmem:[%s883] sm:$0xff]
    %v885 = vld [vmem:[%s883 + $0x8] sm:$0xff]
    %v886 = vld [vmem:[%s883 + $0x10] sm:$0xff]
    %v887 = vld [vmem:[%s883 + $0x18] sm:$0xff]
    %888 = vmatpush.msra.mxu0 %v413
    %889 = vmatpush.msra.mxu0 %v409
    %890 = vmatpush.msra.mxu0 %v405
    %891 = vmatpush.msra.mxu0 %v401
    %892 = vmatpush.msra.mxu0 %v397
    %893 = vmatpush.msra.mxu0 %v393
    %894 = vmatpush.msra.mxu0 %v389
    %895 = vmatpush.msra.mxu0 %v385
    %896 = vmatpush.msra.mxu0 %v381
    %897 = vmatpush.msra.mxu0 %v377
    %898 = vmatpush.msra.mxu0 %v373
    %899 = vmatpush.msra.mxu0 %v369
    %900 = vmatpush.msra.mxu0 %v365
    %901 = vmatpush.msra.mxu0 %v361
    %902 = vmatpush.msra.mxu0 %v357
    %903 = vmatpush.msra.mxu0 %v353
    %904 = vmatmul.f32.gmra.mxu0 %v880
    %v905 = vpop.f32.mrf.mxu0
    %v906 = vadd.f32 0.0, %v905
    %907 = vdwg.mxu0
    %908 = vmatpush.msra.mxu0 %v414
    %909 = vmatpush.msra.mxu0 %v410
    %910 = vmatpush.msra.mxu0 %v406
    %911 = vmatpush.msra.mxu0 %v402
    %912 = vmatpush.msra.mxu0 %v398
    %913 = vmatpush.msra.mxu0 %v394
    %914 = vmatpush.msra.mxu0 %v390
    %915 = vmatpush.msra.mxu0 %v386
    %916 = vmatpush.msra.mxu0 %v382
    %917 = vmatpush.msra.mxu0 %v378
    %918 = vmatpush.msra.mxu0 %v374
    %919 = vmatpush.msra.mxu0 %v370
    %920 = vmatpush.msra.mxu0 %v366
    %921 = vmatpush.msra.mxu0 %v362
    %922 = vmatpush.msra.mxu0 %v358
    %923 = vmatpush.msra.mxu0 %v354
    %924 = vmatmul.f32.gmra.mxu0 %v880
    %v925 = vpop.f32.mrf.mxu0
    %v926 = vadd.f32 0.0, %v925
    %927 = vdwg.mxu0
    %928 = vmatpush.msra.mxu0 %v415
    %929 = vmatpush.msra.mxu0 %v411
    %930 = vmatpush.msra.mxu0 %v407
    %931 = vmatpush.msra.mxu0 %v403
    %932 = vmatpush.msra.mxu0 %v399
    %933 = vmatpush.msra.mxu0 %v395
    %934 = vmatpush.msra.mxu0 %v391
    %935 = vmatpush.msra.mxu0 %v387
    %936 = vmatpush.msra.mxu0 %v383
    %937 = vmatpush.msra.mxu0 %v379
    %938 = vmatpush.msra.mxu0 %v375
    %939 = vmatpush.msra.mxu0 %v371
    %940 = vmatpush.msra.mxu0 %v367
    %941 = vmatpush.msra.mxu0 %v363
    %942 = vmatpush.msra.mxu0 %v359
    %943 = vmatpush.msra.mxu0 %v355
    %944 = vmatmul.f32.gmra.mxu0 %v880
    %v945 = vpop.f32.mrf.mxu0
    %v946 = vadd.f32 0.0, %v945
    %947 = vdwg.mxu0
    %948 = vmatpush.msra.mxu0 %v416
    %949 = vmatpush.msra.mxu0 %v412
    %950 = vmatpush.msra.mxu0 %v408
    %951 = vmatpush.msra.mxu0 %v404
    %952 = vmatpush.msra.mxu0 %v400
    %953 = vmatpush.msra.mxu0 %v396
    %954 = vmatpush.msra.mxu0 %v392
    %955 = vmatpush.msra.mxu0 %v388
    %956 = vmatpush.msra.mxu0 %v384
    %957 = vmatpush.msra.mxu0 %v380
    %958 = vmatpush.msra.mxu0 %v376
    %959 = vmatpush.msra.mxu0 %v372
    %960 = vmatpush.msra.mxu0 %v368
    %961 = vmatpush.msra.mxu0 %v364
    %962 = vmatpush.msra.mxu0 %v360
    %963 = vmatpush.msra.mxu0 %v356
    %964 = vmatmul.f32.gmra.mxu0 %v880
    %v965 = vpop.f32.mrf.mxu0
    %v966 = vadd.f32 0.0, %v965
    %967 = vdwg.mxu0
    %v968 = vadd.f32 %v884, %v906
    %v969 = vadd.f32 %v885, %v926
    %v970 = vadd.f32 %v886, %v946
    %v971 = vadd.f32 %v887, %v966
    %v972 = vxor.u32 %v968, 2147483648
    %v973 = vmul.f32 %v972, 1.442695
    %v974 = vpow.pop %v973
    %v975 = vadd.f32 %v974, 1.0
    %v976 = vrcp.pop %v975
    %v977 = vmul.f32 %v975, %v976
    %v978 = vsub.f32 1.0, %v977
    %v979 = vmul.f32 %v976, %v978
    %v980 = vadd.f32 %v976, %v979
    %vm981 = vweird.f32 %v975
    %vm982 = vweird.f32 %v976
    %vm983 = vmor %vm981, %vm982
    %v984 = vsel %vm983, %v976, %v980
    %v985 = vand.u32 2147483647, %v975
    %vm986 = vcmp.eq.f32.partialorder %v985, 8.507059e+37
    %v987 = vand.u32 %v975, 2147483648
    %v988 = vor.u32 1.1754944e-38, %v987
    %v989 = vsel %vm986, %v988, %v984
    %v990 = vmul.f32 1.0, %v989
    %v991 = vxor.u32 %v969, 2147483648
    %v992 = vmul.f32 %v991, 1.442695
    %v993 = vpow.pop %v992
    %v994 = vadd.f32 %v993, 1.0
    %v995 = vrcp.pop %v994
    %v996 = vmul.f32 %v994, %v995
    %v997 = vsub.f32 1.0, %v996
    %v998 = vmul.f32 %v995, %v997
    %v999 = vadd.f32 %v995, %v998
    %vm1000 = vweird.f32 %v994
    %vm1001 = vweird.f32 %v995
    %vm1002 = vmor %vm1000, %vm1001
    %v1003 = vsel %vm1002, %v995, %v999
    %v1004 = vand.u32 2147483647, %v994
    %vm1005 = vcmp.eq.f32.partialorder %v1004, 8.507059e+37
    %v1006 = vand.u32 %v994, 2147483648
    %v1007 = vor.u32 1.1754944e-38, %v1006
    %v1008 = vsel %vm1005, %v1007, %v1003
    %v1009 = vmul.f32 1.0, %v1008
    %v1010 = vtanh.pop %v970
    %v1011 = vxor.u32 %v971, 2147483648
    %v1012 = vmul.f32 %v1011, 1.442695
    %v1013 = vpow.pop %v1012
    %v1014 = vadd.f32 %v1013, 1.0
    %v1015 = vrcp.pop %v1014
    %v1016 = vmul.f32 %v1014, %v1015
    %v1017 = vsub.f32 1.0, %v1016
    %v1018 = vmul.f32 %v1015, %v1017
    %v1019 = vadd.f32 %v1015, %v1018
    %vm1020 = vweird.f32 %v1014
    %vm1021 = vweird.f32 %v1015
    %vm1022 = vmor %vm1020, %vm1021
    %v1023 = vsel %vm1022, %v1015, %v1019
    %v1024 = vand.u32 2147483647, %v1014
    %vm1025 = vcmp.eq.f32.partialorder %v1024, 8.507059e+37
    %v1026 = vand.u32 %v1014, 2147483648
    %v1027 = vor.u32 1.1754944e-38, %v1026
    %v1028 = vsel %vm1025, %v1027, %v1023
    %v1029 = vmul.f32 1.0, %v1028
    %v1030 = vmul.f32 %v1009, %v878
    %v1031 = vmul.f32 %v990, %v1010
    %v1032 = vadd.f32 %v1030, %v1031
    %v1033 = vtanh.pop %v1032
    %v1034 = vmul.f32 %v1029, %v1033
    %s1035 = smul.u32 4, 4
    %s1036 = smul.addr %s1035, 8
    %s1037 = scalar_lea.vmem [#allocation2], %s1036
    %v1038 = vld [vmem:[%s1037] sm:$0xff]
    %v1039 = vld [vmem:[%s1037 + $0x8] sm:$0xff]
    %v1040 = vld [vmem:[%s1037 + $0x10] sm:$0xff]
    %v1041 = vld [vmem:[%s1037 + $0x18] sm:$0xff]
    %1042 = vmatpush.msra.mxu0 %v413
    %1043 = vmatpush.msra.mxu0 %v409
    %1044 = vmatpush.msra.mxu0 %v405
    %1045 = vmatpush.msra.mxu0 %v401
    %1046 = vmatpush.msra.mxu0 %v397
    %1047 = vmatpush.msra.mxu0 %v393
    %1048 = vmatpush.msra.mxu0 %v389
    %1049 = vmatpush.msra.mxu0 %v385
    %1050 = vmatpush.msra.mxu0 %v381
    %1051 = vmatpush.msra.mxu0 %v377
    %1052 = vmatpush.msra.mxu0 %v373
    %1053 = vmatpush.msra.mxu0 %v369
    %1054 = vmatpush.msra.mxu0 %v365
    %1055 = vmatpush.msra.mxu0 %v361
    %1056 = vmatpush.msra.mxu0 %v357
    %1057 = vmatpush.msra.mxu0 %v353
    %1058 = vmatmul.f32.gmra.mxu0 %v1034
    %v1059 = vpop.f32.mrf.mxu0
    %v1060 = vadd.f32 0.0, %v1059
    %1061 = vdwg.mxu0
    %1062 = vmatpush.msra.mxu0 %v414
    %1063 = vmatpush.msra.mxu0 %v410
    %1064 = vmatpush.msra.mxu0 %v406
    %1065 = vmatpush.msra.mxu0 %v402
    %1066 = vmatpush.msra.mxu0 %v398
    %1067 = vmatpush.msra.mxu0 %v394
    %1068 = vmatpush.msra.mxu0 %v390
    %1069 = vmatpush.msra.mxu0 %v386
    %1070 = vmatpush.msra.mxu0 %v382
    %1071 = vmatpush.msra.mxu0 %v378
    %1072 = vmatpush.msra.mxu0 %v374
    %1073 = vmatpush.msra.mxu0 %v370
    %1074 = vmatpush.msra.mxu0 %v366
    %1075 = vmatpush.msra.mxu0 %v362
    %1076 = vmatpush.msra.mxu0 %v358
    %1077 = vmatpush.msra.mxu0 %v354
    %1078 = vmatmul.f32.gmra.mxu0 %v1034
    %v1079 = vpop.f32.mrf.mxu0
    %v1080 = vadd.f32 0.0, %v1079
    %1081 = vdwg.mxu0
    %1082 = vmatpush.msra.mxu0 %v415
    %1083 = vmatpush.msra.mxu0 %v411
    %1084 = vmatpush.msra.mxu0 %v407
    %1085 = vmatpush.msra.mxu0 %v403
    %1086 = vmatpush.msra.mxu0 %v399
    %1087 = vmatpush.msra.mxu0 %v395
    %1088 = vmatpush.msra.mxu0 %v391
    %1089 = vmatpush.msra.mxu0 %v387
    %1090 = vmatpush.msra.mxu0 %v383
    %1091 = vmatpush.msra.mxu0 %v379
    %1092 = vmatpush.msra.mxu0 %v375
    %1093 = vmatpush.msra.mxu0 %v371
    %1094 = vmatpush.msra.mxu0 %v367
    %1095 = vmatpush.msra.mxu0 %v363
    %1096 = vmatpush.msra.mxu0 %v359
    %1097 = vmatpush.msra.mxu0 %v355
    %1098 = vmatmul.f32.gmra.mxu0 %v1034
    %v1099 = vpop.f32.mrf.mxu0
    %v1100 = vadd.f32 0.0, %v1099
    %1101 = vdwg.mxu0
    %1102 = vmatpush.msra.mxu0 %v416
    %1103 = vmatpush.msra.mxu0 %v412
    %1104 = vmatpush.msra.mxu0 %v408
    %1105 = vmatpush.msra.mxu0 %v404
    %1106 = vmatpush.msra.mxu0 %v400
    %1107 = vmatpush.msra.mxu0 %v396
    %1108 = vmatpush.msra.mxu0 %v392
    %1109 = vmatpush.msra.mxu0 %v388
    %1110 = vmatpush.msra.mxu0 %v384
    %1111 = vmatpush.msra.mxu0 %v380
    %1112 = vmatpush.msra.mxu0 %v376
    %1113 = vmatpush.msra.mxu0 %v372
    %1114 = vmatpush.msra.mxu0 %v368
    %1115 = vmatpush.msra.mxu0 %v364
    %1116 = vmatpush.msra.mxu0 %v360
    %1117 = vmatpush.msra.mxu0 %v356
    %1118 = vmatmul.f32.gmra.mxu0 %v1034
    %v1119 = vpop.f32.mrf.mxu0
    %v1120 = vadd.f32 0.0, %v1119
    %1121 = vdwg.mxu0
    %v1122 = vadd.f32 %v1038, %v1060
    %v1123 = vadd.f32 %v1039, %v1080
    %v1124 = vadd.f32 %v1040, %v1100
    %v1125 = vadd.f32 %v1041, %v1120
    %v1126 = vxor.u32 %v1122, 2147483648
    %v1127 = vmul.f32 %v1126, 1.442695
    %v1128 = vpow.pop %v1127
    %v1129 = vadd.f32 %v1128, 1.0
    %v1130 = vrcp.pop %v1129
    %v1131 = vmul.f32 %v1129, %v1130
    %v1132 = vsub.f32 1.0, %v1131
    %v1133 = vmul.f32 %v1130, %v1132
    %v1134 = vadd.f32 %v1130, %v1133
    %vm1135 = vweird.f32 %v1129
    %vm1136 = vweird.f32 %v1130
    %vm1137 = vmor %vm1135, %vm1136
    %v1138 = vsel %vm1137, %v1130, %v1134
    %v1139 = vand.u32 2147483647, %v1129
    %vm1140 = vcmp.eq.f32.partialorder %v1139, 8.507059e+37
    %v1141 = vand.u32 %v1129, 2147483648
    %v1142 = vor.u32 1.1754944e-38, %v1141
    %v1143 = vsel %vm1140, %v1142, %v1138
    %v1144 = vmul.f32 1.0, %v1143
    %v1145 = vxor.u32 %v1123, 2147483648
    %v1146 = vmul.f32 %v1145, 1.442695
    %v1147 = vpow.pop %v1146
    %v1148 = vadd.f32 %v1147, 1.0
    %v1149 = vrcp.pop %v1148
    %v1150 = vmul.f32 %v1148, %v1149
    %v1151 = vsub.f32 1.0, %v1150
    %v1152 = vmul.f32 %v1149, %v1151
    %v1153 = vadd.f32 %v1149, %v1152
    %vm1154 = vweird.f32 %v1148
    %vm1155 = vweird.f32 %v1149
    %vm1156 = vmor %vm1154, %vm1155
    %v1157 = vsel %vm1156, %v1149, %v1153
    %v1158 = vand.u32 2147483647, %v1148
    %vm1159 = vcmp.eq.f32.partialorder %v1158, 8.507059e+37
    %v1160 = vand.u32 %v1148, 2147483648
    %v1161 = vor.u32 1.1754944e-38, %v1160
    %v1162 = vsel %vm1159, %v1161, %v1157
    %v1163 = vmul.f32 1.0, %v1162
    %v1164 = vtanh.pop %v1124
    %v1165 = vxor.u32 %v1125, 2147483648
    %v1166 = vmul.f32 %v1165, 1.442695
    %v1167 = vpow.pop %v1166
    %v1168 = vadd.f32 %v1167, 1.0
    %v1169 = vrcp.pop %v1168
    %v1170 = vmul.f32 %v1168, %v1169
    %v1171 = vsub.f32 1.0, %v1170
    %v1172 = vmul.f32 %v1169, %v1171
    %v1173 = vadd.f32 %v1169, %v1172
    %vm1174 = vweird.f32 %v1168
    %vm1175 = vweird.f32 %v1169
    %vm1176 = vmor %vm1174, %vm1175
    %v1177 = vsel %vm1176, %v1169, %v1173
    %v1178 = vand.u32 2147483647, %v1168
    %vm1179 = vcmp.eq.f32.partialorder %v1178, 8.507059e+37
    %v1180 = vand.u32 %v1168, 2147483648
    %v1181 = vor.u32 1.1754944e-38, %v1180
    %v1182 = vsel %vm1179, %v1181, %v1177
    %v1183 = vmul.f32 1.0, %v1182
    %v1184 = vmul.f32 %v1163, %v1032
    %v1185 = vmul.f32 %v1144, %v1164
    %v1186 = vadd.f32 %v1184, %v1185
    %v1187 = vtanh.pop %v1186
    %v1188 = vmul.f32 %v1183, %v1187
    %s1189 = smul.u32 5, 4
    %s1190 = smul.addr %s1189, 8
    %s1191 = scalar_lea.vmem [#allocation2], %s1190
    %v1192 = vld [vmem:[%s1191] sm:$0xff]
    %v1193 = vld [vmem:[%s1191 + $0x8] sm:$0xff]
    %v1194 = vld [vmem:[%s1191 + $0x10] sm:$0xff]
    %v1195 = vld [vmem:[%s1191 + $0x18] sm:$0xff]
    %1196 = vmatpush.msra.mxu0 %v413
    %1197 = vmatpush.msra.mxu0 %v409
    %1198 = vmatpush.msra.mxu0 %v405
    %1199 = vmatpush.msra.mxu0 %v401
    %1200 = vmatpush.msra.mxu0 %v397
    %1201 = vmatpush.msra.mxu0 %v393
    %1202 = vmatpush.msra.mxu0 %v389
    %1203 = vmatpush.msra.mxu0 %v385
    %1204 = vmatpush.msra.mxu0 %v381
    %1205 = vmatpush.msra.mxu0 %v377
    %1206 = vmatpush.msra.mxu0 %v373
    %1207 = vmatpush.msra.mxu0 %v369
    %1208 = vmatpush.msra.mxu0 %v365
    %1209 = vmatpush.msra.mxu0 %v361
    %1210 = vmatpush.msra.mxu0 %v357
    %1211 = vmatpush.msra.mxu0 %v353
    %1212 = vmatmul.f32.gmra.mxu0 %v1188
    %v1213 = vpop.f32.mrf.mxu0
    %v1214 = vadd.f32 0.0, %v1213
    %1215 = vdwg.mxu0
    %1216 = vmatpush.msra.mxu0 %v414
    %1217 = vmatpush.msra.mxu0 %v410
    %1218 = vmatpush.msra.mxu0 %v406
    %1219 = vmatpush.msra.mxu0 %v402
    %1220 = vmatpush.msra.mxu0 %v398
    %1221 = vmatpush.msra.mxu0 %v394
    %1222 = vmatpush.msra.mxu0 %v390
    %1223 = vmatpush.msra.mxu0 %v386
    %1224 = vmatpush.msra.mxu0 %v382
    %1225 = vmatpush.msra.mxu0 %v378
    %1226 = vmatpush.msra.mxu0 %v374
    %1227 = vmatpush.msra.mxu0 %v370
    %1228 = vmatpush.msra.mxu0 %v366
    %1229 = vmatpush.msra.mxu0 %v362
    %1230 = vmatpush.msra.mxu0 %v358
    %1231 = vmatpush.msra.mxu0 %v354
    %1232 = vmatmul.f32.gmra.mxu0 %v1188
    %v1233 = vpop.f32.mrf.mxu0
    %v1234 = vadd.f32 0.0, %v1233
    %1235 = vdwg.mxu0
    %1236 = vmatpush.msra.mxu0 %v415
    %1237 = vmatpush.msra.mxu0 %v411
    %1238 = vmatpush.msra.mxu0 %v407
    %1239 = vmatpush.msra.mxu0 %v403
    %1240 = vmatpush.msra.mxu0 %v399
    %1241 = vmatpush.msra.mxu0 %v395
    %1242 = vmatpush.msra.mxu0 %v391
    %1243 = vmatpush.msra.mxu0 %v387
    %1244 = vmatpush.msra.mxu0 %v383
    %1245 = vmatpush.msra.mxu0 %v379
    %1246 = vmatpush.msra.mxu0 %v375
    %1247 = vmatpush.msra.mxu0 %v371
    %1248 = vmatpush.msra.mxu0 %v367
    %1249 = vmatpush.msra.mxu0 %v363
    %1250 = vmatpush.msra.mxu0 %v359
    %1251 = vmatpush.msra.mxu0 %v355
    %1252 = vmatmul.f32.gmra.mxu0 %v1188
    %v1253 = vpop.f32.mrf.mxu0
    %v1254 = vadd.f32 0.0, %v1253
    %1255 = vdwg.mxu0
    %1256 = vmatpush.msra.mxu0 %v416
    %1257 = vmatpush.msra.mxu0 %v412
    %1258 = vmatpush.msra.mxu0 %v408
    %1259 = vmatpush.msra.mxu0 %v404
    %1260 = vmatpush.msra.mxu0 %v400
    %1261 = vmatpush.msra.mxu0 %v396
    %1262 = vmatpush.msra.mxu0 %v392
    %1263 = vmatpush.msra.mxu0 %v388
    %1264 = vmatpush.msra.mxu0 %v384
    %1265 = vmatpush.msra.mxu0 %v380
    %1266 = vmatpush.msra.mxu0 %v376
    %1267 = vmatpush.msra.mxu0 %v372
    %1268 = vmatpush.msra.mxu0 %v368
    %1269 = vmatpush.msra.mxu0 %v364
    %1270 = vmatpush.msra.mxu0 %v360
    %1271 = vmatpush.msra.mxu0 %v356
    %1272 = vmatmul.f32.gmra.mxu0 %v1188
    %v1273 = vpop.f32.mrf.mxu0
    %v1274 = vadd.f32 0.0, %v1273
    %1275 = vdwg.mxu0
    %v1276 = vadd.f32 %v1192, %v1214
    %v1277 = vadd.f32 %v1193, %v1234
    %v1278 = vadd.f32 %v1194, %v1254
    %v1279 = vadd.f32 %v1195, %v1274
    %v1280 = vxor.u32 %v1276, 2147483648
    %v1281 = vmul.f32 %v1280, 1.442695
    %v1282 = vpow.pop %v1281
    %v1283 = vadd.f32 %v1282, 1.0
    %v1284 = vrcp.pop %v1283
    %v1285 = vmul.f32 %v1283, %v1284
    %v1286 = vsub.f32 1.0, %v1285
    %v1287 = vmul.f32 %v1284, %v1286
    %v1288 = vadd.f32 %v1284, %v1287
    %vm1289 = vweird.f32 %v1283
    %vm1290 = vweird.f32 %v1284
    %vm1291 = vmor %vm1289, %vm1290
    %v1292 = vsel %vm1291, %v1284, %v1288
    %v1293 = vand.u32 2147483647, %v1283
    %vm1294 = vcmp.eq.f32.partialorder %v1293, 8.507059e+37
    %v1295 = vand.u32 %v1283, 2147483648
    %v1296 = vor.u32 1.1754944e-38, %v1295
    %v1297 = vsel %vm1294, %v1296, %v1292
    %v1298 = vmul.f32 1.0, %v1297
    %v1299 = vxor.u32 %v1277, 2147483648
    %v1300 = vmul.f32 %v1299, 1.442695
    %v1301 = vpow.pop %v1300
    %v1302 = vadd.f32 %v1301, 1.0
    %v1303 = vrcp.pop %v1302
    %v1304 = vmul.f32 %v1302, %v1303
    %v1305 = vsub.f32 1.0, %v1304
    %v1306 = vmul.f32 %v1303, %v1305
    %v1307 = vadd.f32 %v1303, %v1306
    %vm1308 = vweird.f32 %v1302
    %vm1309 = vweird.f32 %v1303
    %vm1310 = vmor %vm1308, %vm1309
    %v1311 = vsel %vm1310, %v1303, %v1307
    %v1312 = vand.u32 2147483647, %v1302
    %vm1313 = vcmp.eq.f32.partialorder %v1312, 8.507059e+37
    %v1314 = vand.u32 %v1302, 2147483648
    %v1315 = vor.u32 1.1754944e-38, %v1314
    %v1316 = vsel %vm1313, %v1315, %v1311
    %v1317 = vmul.f32 1.0, %v1316
    %v1318 = vtanh.pop %v1278
    %v1319 = vxor.u32 %v1279, 2147483648
    %v1320 = vmul.f32 %v1319, 1.442695
    %v1321 = vpow.pop %v1320
    %v1322 = vadd.f32 %v1321, 1.0
    %v1323 = vrcp.pop %v1322
    %v1324 = vmul.f32 %v1322, %v1323
    %v1325 = vsub.f32 1.0, %v1324
    %v1326 = vmul.f32 %v1323, %v1325
    %v1327 = vadd.f32 %v1323, %v1326
    %vm1328 = vweird.f32 %v1322
    %vm1329 = vweird.f32 %v1323
    %vm1330 = vmor %vm1328, %vm1329
    %v1331 = vsel %vm1330, %v1323, %v1327
    %v1332 = vand.u32 2147483647, %v1322
    %vm1333 = vcmp.eq.f32.partialorder %v1332, 8.507059e+37
    %v1334 = vand.u32 %v1322, 2147483648
    %v1335 = vor.u32 1.1754944e-38, %v1334
    %v1336 = vsel %vm1333, %v1335, %v1331
    %v1337 = vmul.f32 1.0, %v1336
    %v1338 = vmul.f32 %v1317, %v1186
    %v1339 = vmul.f32 %v1298, %v1318
    %v1340 = vadd.f32 %v1338, %v1339
    %v1341 = vtanh.pop %v1340
    %v1342 = vmul.f32 %v1337, %v1341
    %s1343 = smul.u32 6, 4
    %s1344 = smul.addr %s1343, 8
    %s1345 = scalar_lea.vmem [#allocation2], %s1344
    %v1346 = vld [vmem:[%s1345] sm:$0xff]
    %v1347 = vld [vmem:[%s1345 + $0x8] sm:$0xff]
    %v1348 = vld [vmem:[%s1345 + $0x10] sm:$0xff]
    %v1349 = vld [vmem:[%s1345 + $0x18] sm:$0xff]
    %1350 = vmatpush.msra.mxu0 %v413
    %1351 = vmatpush.msra.mxu0 %v409
    %1352 = vmatpush.msra.mxu0 %v405
    %1353 = vmatpush.msra.mxu0 %v401
    %1354 = vmatpush.msra.mxu0 %v397
    %1355 = vmatpush.msra.mxu0 %v393
    %1356 = vmatpush.msra.mxu0 %v389
    %1357 = vmatpush.msra.mxu0 %v385
    %1358 = vmatpush.msra.mxu0 %v381
    %1359 = vmatpush.msra.mxu0 %v377
    %1360 = vmatpush.msra.mxu0 %v373
    %1361 = vmatpush.msra.mxu0 %v369
    %1362 = vmatpush.msra.mxu0 %v365
    %1363 = vmatpush.msra.mxu0 %v361
    %1364 = vmatpush.msra.mxu0 %v357
    %1365 = vmatpush.msra.mxu0 %v353
    %1366 = vmatmul.f32.gmra.mxu0 %v1342
    %v1367 = vpop.f32.mrf.mxu0
    %v1368 = vadd.f32 0.0, %v1367
    %1369 = vdwg.mxu0
    %1370 = vmatpush.msra.mxu0 %v414
    %1371 = vmatpush.msra.mxu0 %v410
    %1372 = vmatpush.msra.mxu0 %v406
    %1373 = vmatpush.msra.mxu0 %v402
    %1374 = vmatpush.msra.mxu0 %v398
    %1375 = vmatpush.msra.mxu0 %v394
    %1376 = vmatpush.msra.mxu0 %v390
    %1377 = vmatpush.msra.mxu0 %v386
    %1378 = vmatpush.msra.mxu0 %v382
    %1379 = vmatpush.msra.mxu0 %v378
    %1380 = vmatpush.msra.mxu0 %v374
    %1381 = vmatpush.msra.mxu0 %v370
    %1382 = vmatpush.msra.mxu0 %v366
    %1383 = vmatpush.msra.mxu0 %v362
    %1384 = vmatpush.msra.mxu0 %v358
    %1385 = vmatpush.msra.mxu0 %v354
    %1386 = vmatmul.f32.gmra.mxu0 %v1342
    %v1387 = vpop.f32.mrf.mxu0
    %v1388 = vadd.f32 0.0, %v1387
    %1389 = vdwg.mxu0
    %1390 = vmatpush.msra.mxu0 %v415
    %1391 = vmatpush.msra.mxu0 %v411
    %1392 = vmatpush.msra.mxu0 %v407
    %1393 = vmatpush.msra.mxu0 %v403
    %1394 = vmatpush.msra.mxu0 %v399
    %1395 = vmatpush.msra.mxu0 %v395
    %1396 = vmatpush.msra.mxu0 %v391
    %1397 = vmatpush.msra.mxu0 %v387
    %1398 = vmatpush.msra.mxu0 %v383
    %1399 = vmatpush.msra.mxu0 %v379
    %1400 = vmatpush.msra.mxu0 %v375
    %1401 = vmatpush.msra.mxu0 %v371
    %1402 = vmatpush.msra.mxu0 %v367
    %1403 = vmatpush.msra.mxu0 %v363
    %1404 = vmatpush.msra.mxu0 %v359
    %1405 = vmatpush.msra.mxu0 %v355
    %1406 = vmatmul.f32.gmra.mxu0 %v1342
    %v1407 = vpop.f32.mrf.mxu0
    %v1408 = vadd.f32 0.0, %v1407
    %1409 = vdwg.mxu0
    %1410 = vmatpush.msra.mxu0 %v416
    %1411 = vmatpush.msra.mxu0 %v412
    %1412 = vmatpush.msra.mxu0 %v408
    %1413 = vmatpush.msra.mxu0 %v404
    %1414 = vmatpush.msra.mxu0 %v400
    %1415 = vmatpush.msra.mxu0 %v396
    %1416 = vmatpush.msra.mxu0 %v392
    %1417 = vmatpush.msra.mxu0 %v388
    %1418 = vmatpush.msra.mxu0 %v384
    %1419 = vmatpush.msra.mxu0 %v380
    %1420 = vmatpush.msra.mxu0 %v376
    %1421 = vmatpush.msra.mxu0 %v372
    %1422 = vmatpush.msra.mxu0 %v368
    %1423 = vmatpush.msra.mxu0 %v364
    %1424 = vmatpush.msra.mxu0 %v360
    %1425 = vmatpush.msra.mxu0 %v356
    %1426 = vmatmul.f32.gmra.mxu0 %v1342
    %v1427 = vpop.f32.mrf.mxu0
    %v1428 = vadd.f32 0.0, %v1427
    %1429 = vdwg.mxu0
    %v1430 = vadd.f32 %v1346, %v1368
    %v1431 = vadd.f32 %v1347, %v1388
    %v1432 = vadd.f32 %v1348, %v1408
    %v1433 = vadd.f32 %v1349, %v1428
    %v1434 = vxor.u32 %v1430, 2147483648
    %v1435 = vmul.f32 %v1434, 1.442695
    %v1436 = vpow.pop %v1435
    %v1437 = vadd.f32 %v1436, 1.0
    %v1438 = vrcp.pop %v1437
    %v1439 = vmul.f32 %v1437, %v1438
    %v1440 = vsub.f32 1.0, %v1439
    %v1441 = vmul.f32 %v1438, %v1440
    %v1442 = vadd.f32 %v1438, %v1441
    %vm1443 = vweird.f32 %v1437
    %vm1444 = vweird.f32 %v1438
    %vm1445 = vmor %vm1443, %vm1444
    %v1446 = vsel %vm1445, %v1438, %v1442
    %v1447 = vand.u32 2147483647, %v1437
    %vm1448 = vcmp.eq.f32.partialorder %v1447, 8.507059e+37
    %v1449 = vand.u32 %v1437, 2147483648
    %v1450 = vor.u32 1.1754944e-38, %v1449
    %v1451 = vsel %vm1448, %v1450, %v1446
    %v1452 = vmul.f32 1.0, %v1451
    %v1453 = vxor.u32 %v1431, 2147483648
    %v1454 = vmul.f32 %v1453, 1.442695
    %v1455 = vpow.pop %v1454
    %v1456 = vadd.f32 %v1455, 1.0
    %v1457 = vrcp.pop %v1456
    %v1458 = vmul.f32 %v1456, %v1457
    %v1459 = vsub.f32 1.0, %v1458
    %v1460 = vmul.f32 %v1457, %v1459
    %v1461 = vadd.f32 %v1457, %v1460
    %vm1462 = vweird.f32 %v1456
    %vm1463 = vweird.f32 %v1457
    %vm1464 = vmor %vm1462, %vm1463
    %v1465 = vsel %vm1464, %v1457, %v1461
    %v1466 = vand.u32 2147483647, %v1456
    %vm1467 = vcmp.eq.f32.partialorder %v1466, 8.507059e+37
    %v1468 = vand.u32 %v1456, 2147483648
    %v1469 = vor.u32 1.1754944e-38, %v1468
    %v1470 = vsel %vm1467, %v1469, %v1465
    %v1471 = vmul.f32 1.0, %v1470
    %v1472 = vtanh.pop %v1432
    %v1473 = vxor.u32 %v1433, 2147483648
    %v1474 = vmul.f32 %v1473, 1.442695
    %v1475 = vpow.pop %v1474
    %v1476 = vadd.f32 %v1475, 1.0
    %v1477 = vrcp.pop %v1476
    %v1478 = vmul.f32 %v1476, %v1477
    %v1479 = vsub.f32 1.0, %v1478
    %v1480 = vmul.f32 %v1477, %v1479
    %v1481 = vadd.f32 %v1477, %v1480
    %vm1482 = vweird.f32 %v1476
    %vm1483 = vweird.f32 %v1477
    %vm1484 = vmor %vm1482, %vm1483
    %v1485 = vsel %vm1484, %v1477, %v1481
    %v1486 = vand.u32 2147483647, %v1476
    %vm1487 = vcmp.eq.f32.partialorder %v1486, 8.507059e+37
    %v1488 = vand.u32 %v1476, 2147483648
    %v1489 = vor.u32 1.1754944e-38, %v1488
    %v1490 = vsel %vm1487, %v1489, %v1485
    %v1491 = vmul.f32 1.0, %v1490
    %v1492 = vmul.f32 %v1471, %v1340
    %v1493 = vmul.f32 %v1452, %v1472
    %v1494 = vadd.f32 %v1492, %v1493
    %v1495 = vtanh.pop %v1494
    %v1496 = vmul.f32 %v1491, %v1495
    %s1497 = smul.u32 7, 4
    %s1498 = smul.addr %s1497, 8
    %s1499 = scalar_lea.vmem [#allocation2], %s1498
    %v1500 = vld [vmem:[%s1499] sm:$0xff]
    %v1501 = vld [vmem:[%s1499 + $0x8] sm:$0xff]
    %v1502 = vld [vmem:[%s1499 + $0x10] sm:$0xff]
    %v1503 = vld [vmem:[%s1499 + $0x18] sm:$0xff]
    %1504 = vmatpush.msra.mxu0 %v413
    %1505 = vmatpush.msra.mxu0 %v409
    %1506 = vmatpush.msra.mxu0 %v405
    %1507 = vmatpush.msra.mxu0 %v401
    %1508 = vmatpush.msra.mxu0 %v397
    %1509 = vmatpush.msra.mxu0 %v393
    %1510 = vmatpush.msra.mxu0 %v389
    %1511 = vmatpush.msra.mxu0 %v385
    %1512 = vmatpush.msra.mxu0 %v381
    %1513 = vmatpush.msra.mxu0 %v377
    %1514 = vmatpush.msra.mxu0 %v373
    %1515 = vmatpush.msra.mxu0 %v369
    %1516 = vmatpush.msra.mxu0 %v365
    %1517 = vmatpush.msra.mxu0 %v361
    %1518 = vmatpush.msra.mxu0 %v357
    %1519 = vmatpush.msra.mxu0 %v353
    %1520 = vmatmul.f32.gmra.mxu0 %v1496
    %v1521 = vpop.f32.mrf.mxu0
    %v1522 = vadd.f32 0.0, %v1521
    %1523 = vdwg.mxu0
    %1524 = vmatpush.msra.mxu0 %v414
    %1525 = vmatpush.msra.mxu0 %v410
    %1526 = vmatpush.msra.mxu0 %v406
    %1527 = vmatpush.msra.mxu0 %v402
    %1528 = vmatpush.msra.mxu0 %v398
    %1529 = vmatpush.msra.mxu0 %v394
    %1530 = vmatpush.msra.mxu0 %v390
    %1531 = vmatpush.msra.mxu0 %v386
    %1532 = vmatpush.msra.mxu0 %v382
    %1533 = vmatpush.msra.mxu0 %v378
    %1534 = vmatpush.msra.mxu0 %v374
    %1535 = vmatpush.msra.mxu0 %v370
    %1536 = vmatpush.msra.mxu0 %v366
    %1537 = vmatpush.msra.mxu0 %v362
    %1538 = vmatpush.msra.mxu0 %v358
    %1539 = vmatpush.msra.mxu0 %v354
    %1540 = vmatmul.f32.gmra.mxu0 %v1496
    %v1541 = vpop.f32.mrf.mxu0
    %v1542 = vadd.f32 0.0, %v1541
    %1543 = vdwg.mxu0
    %1544 = vmatpush.msra.mxu0 %v415
    %1545 = vmatpush.msra.mxu0 %v411
    %1546 = vmatpush.msra.mxu0 %v407
    %1547 = vmatpush.msra.mxu0 %v403
    %1548 = vmatpush.msra.mxu0 %v399
    %1549 = vmatpush.msra.mxu0 %v395
    %1550 = vmatpush.msra.mxu0 %v391
    %1551 = vmatpush.msra.mxu0 %v387
    %1552 = vmatpush.msra.mxu0 %v383
    %1553 = vmatpush.msra.mxu0 %v379
    %1554 = vmatpush.msra.mxu0 %v375
    %1555 = vmatpush.msra.mxu0 %v371
    %1556 = vmatpush.msra.mxu0 %v367
    %1557 = vmatpush.msra.mxu0 %v363
    %1558 = vmatpush.msra.mxu0 %v359
    %1559 = vmatpush.msra.mxu0 %v355
    %1560 = vmatmul.f32.gmra.mxu0 %v1496
    %v1561 = vpop.f32.mrf.mxu0
    %v1562 = vadd.f32 0.0, %v1561
    %1563 = vdwg.mxu0
    %1564 = vmatpush.msra.mxu0 %v416
    %1565 = vmatpush.msra.mxu0 %v412
    %1566 = vmatpush.msra.mxu0 %v408
    %1567 = vmatpush.msra.mxu0 %v404
    %1568 = vmatpush.msra.mxu0 %v400
    %1569 = vmatpush.msra.mxu0 %v396
    %1570 = vmatpush.msra.mxu0 %v392
    %1571 = vmatpush.msra.mxu0 %v388
    %1572 = vmatpush.msra.mxu0 %v384
    %1573 = vmatpush.msra.mxu0 %v380
    %1574 = vmatpush.msra.mxu0 %v376
    %1575 = vmatpush.msra.mxu0 %v372
    %1576 = vmatpush.msra.mxu0 %v368
    %1577 = vmatpush.msra.mxu0 %v364
    %1578 = vmatpush.msra.mxu0 %v360
    %1579 = vmatpush.msra.mxu0 %v356
    %1580 = vmatmul.f32.gmra.mxu0 %v1496
    %v1581 = vpop.f32.mrf.mxu0
    %v1582 = vadd.f32 0.0, %v1581
    %1583 = vdwg.mxu0
    %v1584 = vadd.f32 %v1500, %v1522
    %v1585 = vadd.f32 %v1501, %v1542
    %v1586 = vadd.f32 %v1502, %v1562
    %v1587 = vadd.f32 %v1503, %v1582
    %v1588 = vxor.u32 %v1584, 2147483648
    %v1589 = vmul.f32 %v1588, 1.442695
    %v1590 = vpow.pop %v1589
    %v1591 = vadd.f32 %v1590, 1.0
    %v1592 = vrcp.pop %v1591
    %v1593 = vmul.f32 %v1591, %v1592
    %v1594 = vsub.f32 1.0, %v1593
    %v1595 = vmul.f32 %v1592, %v1594
    %v1596 = vadd.f32 %v1592, %v1595
    %vm1597 = vweird.f32 %v1591
    %vm1598 = vweird.f32 %v1592
    %vm1599 = vmor %vm1597, %vm1598
    %v1600 = vsel %vm1599, %v1592, %v1596
    %v1601 = vand.u32 2147483647, %v1591
    %vm1602 = vcmp.eq.f32.partialorder %v1601, 8.507059e+37
    %v1603 = vand.u32 %v1591, 2147483648
    %v1604 = vor.u32 1.1754944e-38, %v1603
    %v1605 = vsel %vm1602, %v1604, %v1600
    %v1606 = vmul.f32 1.0, %v1605
    %v1607 = vxor.u32 %v1585, 2147483648
    %v1608 = vmul.f32 %v1607, 1.442695
    %v1609 = vpow.pop %v1608
    %v1610 = vadd.f32 %v1609, 1.0
    %v1611 = vrcp.pop %v1610
    %v1612 = vmul.f32 %v1610, %v1611
    %v1613 = vsub.f32 1.0, %v1612
    %v1614 = vmul.f32 %v1611, %v1613
    %v1615 = vadd.f32 %v1611, %v1614
    %vm1616 = vweird.f32 %v1610
    %vm1617 = vweird.f32 %v1611
    %vm1618 = vmor %vm1616, %vm1617
    %v1619 = vsel %vm1618, %v1611, %v1615
    %v1620 = vand.u32 2147483647, %v1610
    %vm1621 = vcmp.eq.f32.partialorder %v1620, 8.507059e+37
    %v1622 = vand.u32 %v1610, 2147483648
    %v1623 = vor.u32 1.1754944e-38, %v1622
    %v1624 = vsel %vm1621, %v1623, %v1619
    %v1625 = vmul.f32 1.0, %v1624
    %v1626 = vtanh.pop %v1586
    %v1627 = vxor.u32 %v1587, 2147483648
    %v1628 = vmul.f32 %v1627, 1.442695
    %v1629 = vpow.pop %v1628
    %v1630 = vadd.f32 %v1629, 1.0
    %v1631 = vrcp.pop %v1630
    %v1632 = vmul.f32 %v1630, %v1631
    %v1633 = vsub.f32 1.0, %v1632
    %v1634 = vmul.f32 %v1631, %v1633
    %v1635 = vadd.f32 %v1631, %v1634
    %vm1636 = vweird.f32 %v1630
    %vm1637 = vweird.f32 %v1631
    %vm1638 = vmor %vm1636, %vm1637
    %v1639 = vsel %vm1638, %v1631, %v1635
    %v1640 = vand.u32 2147483647, %v1630
    %vm1641 = vcmp.eq.f32.partialorder %v1640, 8.507059e+37
    %v1642 = vand.u32 %v1630, 2147483648
    %v1643 = vor.u32 1.1754944e-38, %v1642
    %v1644 = vsel %vm1641, %v1643, %v1639
    %v1645 = vmul.f32 1.0, %v1644
    %v1646 = vmul.f32 %v1625, %v1494
    %v1647 = vmul.f32 %v1606, %v1626
    %v1648 = vadd.f32 %v1646, %v1647
    %v1649 = vtanh.pop %v1648
    %v1650 = vmul.f32 %v1645, %v1649
    %1651 = vst [vmem:[#allocation3] sm:$0xff] %v1650
    %1652 = vst [vmem:[#allocation4] sm:$0xff] %v1648
    // Predicated region
    $region50: #{tpu_custom_call.1} parent=1 // pred_check
      %p1653 = pneg %p100
    $region51: #{tpu_custom_call.1} parent=1 // pred_check_branch
      %1655 = sbr.rel (%p1653) target = $region53
    $region52: #{tpu_custom_call.1} parent=1 // pred_region
      %v1656 = vld [vmem:[#allocation13] sm:$0xff]
      %v1657 = vld [vmem:[#allocation13 + $0x8] sm:$0xff]
      %v1658 = vld [vmem:[#allocation13 + $0x10] sm:$0xff]
      %v1659 = vld [vmem:[#allocation13 + $0x18] sm:$0xff]
      %v1660 = vld [vmem:[#allocation13 + $0x20] sm:$0xff]
      %v1661 = vld [vmem:[#allocation13 + $0x28] sm:$0xff]
      %v1662 = vld [vmem:[#allocation13 + $0x30] sm:$0xff]
      %v1663 = vld [vmem:[#allocation13 + $0x38] sm:$0xff]
      %v1664 = vld [vmem:[#allocation13 + $0x40] sm:$0xff]
      %v1665 = vld [vmem:[#allocation13 + $0x48] sm:$0xff]
      %v1666 = vld [vmem:[#allocation13 + $0x50] sm:$0xff]
      %v1667 = vld [vmem:[#allocation13 + $0x58] sm:$0xff]
      %v1668 = vld [vmem:[#allocation13 + $0x60] sm:$0xff]
      %v1669 = vld [vmem:[#allocation13 + $0x68] sm:$0xff]
      %v1670 = vld [vmem:[#allocation13 + $0x70] sm:$0xff]
      %v1671 = vld [vmem:[#allocation13 + $0x78] sm:$0xff]
      %v1672 = vld [vmem:[%s5] sm:$0x1]
      %v1674 = vperm.slane %v1672, 0
      %1676 = vmatpush.msra.mxu0 %v1671
      %1677 = vmatpush.msra.mxu0 %v1670
      %1678 = vmatpush.msra.mxu0 %v1669
      %1679 = vmatpush.msra.mxu0 %v1668
      %1680 = vmatpush.msra.mxu0 %v1667
      %1681 = vmatpush.msra.mxu0 %v1666
      %1682 = vmatpush.msra.mxu0 %v1665
      %1683 = vmatpush.msra.mxu0 %v1664
      %1684 = vmatpush.msra.mxu0 %v1663
      %1685 = vmatpush.msra.mxu0 %v1662
      %1686 = vmatpush.msra.mxu0 %v1661
      %1687 = vmatpush.msra.mxu0 %v1660
      %1688 = vmatpush.msra.mxu0 %v1659
      %1689 = vmatpush.msra.mxu0 %v1658
      %1690 = vmatpush.msra.mxu0 %v1657
      %1691 = vmatpush.msra.mxu0 %v1656
      %1692 = vmatmul.f32.gmra.mxu0 %v1650
      %v1693 = vpop.f32.mrf.mxu0
      %v1694 = vadd.f32 %v1674, %v1693
      %1695 = vdwg.mxu0
      %1696 = vst [vmem:[#allocation14] sm:$0xff] %v1694
    $region53: #{tpu_custom_call.1} parent=1 // pred_fallthru
      _
    // Predicated region
    $region54: #{tpu_custom_call.1} parent=1 // pred_check
      _
    $region55: #{tpu_custom_call.1} parent=1 // pred_check_branch
      %1698 = sbr.rel (0) target = $region57
    $region56: #{tpu_custom_call.1} parent=1 // pred_region
      %1700 = vsyncadd [#allocation7], 0
      %s1702 = sshll.u32 [#allocation14], 4
      %s1703 = int_to_ptr.vmem [resolvable:$true] %s1702
      %s1704 = sshll.u32 %s6, 4
      %s1705 = int_to_ptr.hbm [resolvable:$true] %s1704
      %1707 = dma.vmem_to_hbm [thread:$0]  %s1703, 128, %s1705, [#allocation7]
    $region57: #{tpu_custom_call.1} parent=1 // pred_fallthru
      _
    // Predicated region
    $region58: #{tpu_custom_call.1} parent=1 // pred_check
      _
    $region59: #{tpu_custom_call.1} parent=1 // pred_check_branch
      %1709 = sbr.rel (0) target = $region61
    $region60: #{tpu_custom_call.1} parent=1 // pred_region
      %1711 = dma.done [#allocation7], 128
    $region61: #{tpu_custom_call.1} parent=1 // pred_fallthru
      _
    %1712 = vsyncpa [#allocation6], 1
    %1713 = vsyncpa [#allocation9], 1
    %1714 = vsyncpa [#allocation12], 1
    %1715 = vsyncpa [#allocation7], 1

</llo_original>
